<compile_context>
chip_gen: v7x
topology: tpu7x:2x2x1
jax: 0.10.0
libtpu: 0.0.40
codegen_flags: <defaults>
</compile_context>

<pallas_src>
import functools

import jax
import jax.numpy as jnp
from jax import lax
from jax.experimental import pallas as pl
from jax.experimental.pallas import tpu as pltpu

_INV_SQRT2 = 0.7071067811865476
_INV_SQRT2PI = 0.3989422804014327
_LN2 = 0.6931471805599453

COMPUTE_DTYPE = jnp.bfloat16   # matmul-input dtype (accumulation stays f32)
ACT_DTYPE = jnp.bfloat16       # dtype of the h1 activation scratch


# ----------------------------------------------------------------------------
# Helpers
# ----------------------------------------------------------------------------

def _allowed_taps(kh, kw, mask_type):
    """Spatial taps kept by the PixelCNN causal mask ('A' excludes center)."""
    ch, cw = kh // 2, kw // 2
    limit = cw + (1 if mask_type == "B" else 0)
    taps = []
    for dy in range(kh):
        for dx in range(kw):
            if dy < ch or (dy == ch and dx < limit):
                taps.append((dy, dx))
    return tuple(taps)


def _round_up(x, m):
    return (x + m - 1) // m * m


# ----------------------------------------------------------------------------
# Fused forward kernel: conv7x7(A) -> ReLU -> conv3x3(B) -> ReLU -> 1x1 ->
# mixture-of-Gaussians CDF flow head.  One grid step == one batch element.
# ----------------------------------------------------------------------------

def _fused_forward_kernel(x_ref, mask_ref, w1_ref, b1_ref, w2_ref, b2_ref,
                          w3_ref, b3_ref, z_ref, ld_ref,
                          h1_ref, col1_ref, col2_ref,
                          *, taps1, taps2, wp, start1, m, k1, k1p,
                          hidden, n_comp, n_ch):
    """Refs (per grid step b):
      x_ref   : (1, C, Hp*Wp) f32   zero-padded image, flat lane-dense pixels
      mask_ref: (1, m)        f32   1.0 at valid pixels, 0.0 at pad columns
      w1_ref  : (hidden, k1p) bf16  packed mask-A 7x7 taps (zero-padded K)
      b1_ref  : (hidden, 1)   f32
      w2_ref  : (hidden, 5*hidden) bf16  packed mask-B 3x3 taps
      b2_ref  : (hidden, 1)   f32
      w3_ref  : (3*K*C, hidden) bf16     transposed 1x1-conv weight
      b3_ref  : (3*K*C, 1)    f32
      z_ref / ld_ref : (1, C, m) f32 outputs (flat padded-pixel layout)
      h1_ref  : (hidden, start1 + m) bf16 VMEM scratch (padded h1)
      col1_ref: (k1p, m) f32 VMEM scratch (conv1 im2col slab)
      col2_ref: (5*hidden, m) bf16 VMEM scratch (conv2 im2col slab)
    """
    # ---- conv1: masked 7x7 (type A) as ONE MXU matmul over an im2col slab --
    for t, (dy, dx) in enumerate(taps1):
        off = dy * wp + dx                       # static lane offset per tap
        col1_ref[t * n_ch:(t + 1) * n_ch, :] = x_ref[0, :, off:off + m]
    if k1p > k1:                                 # zero the K-padding rows
        col1_ref[k1:k1p, :] = jnp.zeros((k1p - k1, m), col1_ref.dtype)

    h1 = jnp.dot(w1_ref[...], col1_ref[...].astype(w1_ref.dtype),
                 preferred_element_type=jnp.float32)        # (hidden, m)
    h1 = jnp.maximum(h1 + b1_ref[...], 0.0) * mask_ref[...]

    # Store h1 (bf16) in the common zero-padded flat layout; the leading pad
    # region supplies conv2's top/left zero padding, the mask already zeroed
    # the pad columns inside the written range.
    h1_ref[:, :start1] = jnp.zeros((hidden, start1), h1_ref.dtype)
    h1_ref[:, start1:start1 + m] = h1.astype(h1_ref.dtype)

    # ---- conv2: masked 3x3 (type B) as ONE MXU matmul over an im2col slab --
    for t, (dy, dx) in enumerate(taps2):
        off = start1 + (dy - 1) * wp + (dx - 1)  # static, >= 0 by layout
        col2_ref[t * hidden:(t + 1) * hidden, :] = h1_ref[:, off:off + m]
    h2 = jnp.dot(w2_ref[...], col2_ref[...],
                 preferred_element_type=jnp.float32)        # (hidden, m)
    h2 = jnp.maximum(h2 + b2_ref[...], 0.0)

    # ---- fused 1x1 conv + mixture-of-Gaussians CDF flow head (lane-dense) --
    y = jnp.dot(w3_ref[...], h2.astype(w3_ref.dtype),
                preferred_element_type=jnp.float32) + b3_ref[...]  # (3KC, m)

    kc = n_comp * n_ch
    wl = y[0:kc].reshape(n_comp, n_ch, m)
    mu = y[kc:2 * kc].reshape(n_comp, n_ch, m)
    ls = y[2 * kc:3 * kc].reshape(n_comp, n_ch, m)
    xv = x_ref[0, :, start1:start1 + m][None]               # (1, C, m) f32

    # Exact softmax over the mixture axis (K-1 elementwise maxes/adds + EUP).
    mx = jnp.max(wl, axis=0, keepdims=True)
    e = jnp.exp(wl - mx)
    wk = e / jnp.sum(e, axis=0, keepdims=True)

    inv_s = jnp.exp(-ls)                                    # 1/sigma, no div
    tn = (xv - mu) * inv_s
    cdf = 0.5 * (1.0 + lax.erf(tn * _INV_SQRT2))
    pdf = jnp.exp(-0.5 * (tn * tn)) * (_INV_SQRT2PI * inv_s)

    z_ref[0] = jnp.clip(jnp.sum(wk * cdf, axis=0), 0.0, 1.0)
    ld_ref[0] = jnp.log(jnp.sum(wk * pdf, axis=0)) - _LN2


# ----------------------------------------------------------------------------
# Parameters & forward wrapper
# ----------------------------------------------------------------------------

def init_params(key, c_in, hidden, n_comp):
    k1, k2, k3 = jax.random.split(key, 3)

    def conv_w(k, kh, kw, cin, cout):
        fan_in = kh * kw * cin
        return (jax.random.normal(k, (kh, kw, cin, cout), jnp.float32)
                / jnp.sqrt(jnp.float32(fan_in)))

    out_ch = 3 * n_comp * c_in
    return {
        "w1": conv_w(k1, 7, 7, c_in, hidden),       # 7x7, mask type A
        "b1": jnp.zeros((hidden,), jnp.float32),
        "w2": conv_w(k2, 3, 3, hidden, hidden),     # 3x3, mask type B
        "b2": jnp.zeros((hidden,), jnp.float32),
        "w3": (jax.random.normal(k3, (hidden, out_ch), jnp.float32)
               / jnp.sqrt(jnp.float32(hidden))),    # 1x1 output conv
        "b3": jnp.zeros((out_ch,), jnp.float32),
    }


@functools.partial(jax.jit, static_argnames=("n_comp",))
def flow_pixel_cnn_forward(params, x_nchw, n_comp):
    """Returns (z, log_det), each (B, C, H, W) -- matches the PyTorch module."""
    B, C, H, W = x_nchw.shape
    hidden = params["b1"].shape[0]
    kc3 = 3 * n_comp * C
    assert hidden % 8 == 0

    taps1 = _allowed_taps(7, 7, "A")     # 24 allowed taps
    taps2 = _allowed_taps(3, 3, "B")     # 5 allowed taps
    pad = 3                              # conv1 half-width (common layout)
    wp = W + 2 * pad
    hp = H + 2 * pad
    npad = hp * wp
    start1 = pad * wp + pad              # flat position of pixel (0, 0)
    m = H * wp                           # computed positions per image

    # Zero-padded image, flattened to a lane-dense pixel axis (f32 so the
    # flow head reads full-precision pixel values from the same slab).
    x_flat = jnp.pad(
        x_nchw, ((0, 0), (0, 0), (pad, pad), (pad, pad))).reshape(B, C, npad)

    # Validity mask over the m computed positions (0 on pad columns).
    mask = ((jnp.arange(m) % wp) < W).astype(jnp.float32).reshape(1, m)

    # Pack the mask-allowed conv taps as (Cout, T*Cin) matmul operands.
    k1 = len(taps1) * C
    k1p = _round_up(k1, 32)
    w1m = jnp.concatenate([params["w1"][dy, dx] for dy, dx in taps1], axis=0)
    w1m = jnp.pad(w1m, ((0, k1p - k1), (0, 0)))
    w1t = w1m.T.astype(COMPUTE_DTYPE)                         # (hidden, k1p)
    b1c = params["b1"].reshape(hidden, 1).astype(jnp.float32)

    k2 = len(taps2) * hidden
    w2m = jnp.concatenate([params["w2"][dy, dx] for dy, dx in taps2], axis=0)
    w2t = w2m.T.astype(COMPUTE_DTYPE)                         # (hidden, k2)
    b2c = params["b2"].reshape(hidden, 1).astype(jnp.float32)

    w3t = params["w3"].T.astype(COMPUTE_DTYPE)                # (3KC, hidden)
    b3c = params["b3"].reshape(kc3, 1).astype(jnp.float32)

    kern = functools.partial(
        _fused_forward_kernel, taps1=taps1, taps2=taps2, wp=wp,
        start1=start1, m=m, k1=k1, k1p=k1p, hidden=hidden,
        n_comp=n_comp, n_ch=C)

    z_pad, ld_pad = pl.pallas_call(
        kern,
        out_shape=(jax.ShapeDtypeStruct((B, C, m), jnp.float32),
                   jax.ShapeDtypeStruct((B, C, m), jnp.float32)),
        grid_spec=pltpu.PrefetchScalarGridSpec(
            num_scalar_prefetch=0,
            grid=(B,),
            in_specs=[
                pl.BlockSpec((1, C, npad), lambda b: (b, 0, 0)),
                pl.BlockSpec((1, m), lambda b: (0, 0)),
                pl.BlockSpec((hidden, k1p), lambda b: (0, 0)),
                pl.BlockSpec((hidden, 1), lambda b: (0, 0)),
                pl.BlockSpec((hidden, k2), lambda b: (0, 0)),
                pl.BlockSpec((hidden, 1), lambda b: (0, 0)),
                pl.BlockSpec((kc3, hidden), lambda b: (0, 0)),
                pl.BlockSpec((kc3, 1), lambda b: (0, 0)),
            ],
            out_specs=(pl.BlockSpec((1, C, m), lambda b: (b, 0, 0)),
                       pl.BlockSpec((1, C, m), lambda b: (b, 0, 0))),
            scratch_shapes=[
                pltpu.VMEM((hidden, start1 + m), ACT_DTYPE),   # padded h1
                pltpu.VMEM((k1p, m), jnp.float32),             # conv1 im2col
                pltpu.VMEM((k2, m), ACT_DTYPE),                # conv2 im2col
            ]),
        compiler_params=pltpu.CompilerParams(
            dimension_semantics=("parallel",),
            vmem_limit_bytes=48 * 1024 * 1024),
    )(x_flat, mask, w1t, b1c, w2t, b2c, w3t, b3c)

    # Drop the pad columns of the flat layout -> (B, C, H, W), NCHW like torch.
    z = z_pad.reshape(B, C, H, wp)[:, :, :, :W]
    ld = ld_pad.reshape(B, C, H, wp)[:, :, :, :W]
    return z, ld


# ----------------------------------------------------------------------------
# Pure-JAX (f32) reference of the same forward pass, for validation
# ----------------------------------------------------------------------------

def reference_forward(params, x_nchw, n_comp):
    B, C, H, W = x_nchw.shape
    x_nhwc = jnp.transpose(x_nchw, (0, 2, 3, 1))

    def conv(x, w, b, mask_type, relu):
        kh, kw, _, cout = w.shape
        ph, pw = kh // 2, kw // 2
        hh, ww = x.shape[1], x.shape[2]
        xp = jnp.pad(x, ((0, 0), (ph, ph), (pw, pw), (0, 0)))
        acc = jnp.zeros(x.shape[:3] + (cout,), jnp.float32) + b
        for dy, dx in _allowed_taps(kh, kw, mask_type):
            acc = acc + jnp.einsum("bhwc,cd->bhwd",
                                   xp[:, dy:dy + hh, dx:dx + ww, :], w[dy, dx])
        return jnp.maximum(acc, 0.0) if relu else acc

    h1 = conv(x_nhwc, params["w1"], params["b1"], "A", True)
    h2 = conv(h1, params["w2"], params["b2"], "B", True)
    y = jnp.einsum("bhwk,kd->bhwd", h2, params["w3"]) + params["b3"]
    pix = y.reshape(B, H, W, 3 * n_comp, C).transpose(0, 3, 4, 1, 2)
    wl, mu, ls = jnp.split(pix, 3, axis=1)
    wk = jax.nn.softmax(wl, axis=1)
    xb = x_nchw[:, None, :, :, :]
    s = jnp.exp(ls)
    t = (xb - mu) / s
    cdf = 0.5 * (1.0 + lax.erf(t * _INV_SQRT2))
    pdf = jnp.exp(-0.5 * t * t) * _INV_SQRT2PI / s
    z = jnp.clip(jnp.sum(wk * cdf, axis=1), 0.0, 1.0)
    ld = jnp.log(jnp.sum(wk * pdf, axis=1)) - _LN2
    return z, ld


# ----------------------------------------------------------------------------
# Demo
# ----------------------------------------------------------------------------

if __name__ == "__main__":
    B, C, H, W = 2, 1, 16, 16
    N_COMP = 4
    HIDDEN = 32

    key = jax.random.PRNGKey(0)
    k_params, k_x = jax.random.split(key)
    params = init_params(k_params, C, HIDDEN, N_COMP)
    x = jax.random.uniform(k_x, (B, C, H, W), jnp.float32)

    z, log_det = flow_pixel_cnn_forward(params, x, N_COMP)
    jax.block_until_ready((z, log_det))

    assert z.shape == (B, C, H, W) and log_det.shape == (B, C, H, W)
    assert bool(jnp.all(jnp.isfinite(z))) and bool(jnp.all(jnp.isfinite(log_det)))
    assert bool(jnp.all((z >= 0.0) & (z <= 1.0)))

    # Cross-check against a pure-JAX f32 reference (tolerances cover the
    # bf16 matmul inputs).
    z_ref, ld_ref = reference_forward(params, x, N_COMP)
    assert float(jnp.max(jnp.abs(z - z_ref))) < 8e-2
    assert float(jnp.max(jnp.abs(log_det - ld_ref))) < 1.5e-1

    print("KERNEL_OK")
</pallas_src>

<mosaic_0001>
module attributes {stable_mosaic.version = 11 : i64} {
  func.func @_fused_forward_kernel(%arg0: i32, %arg1: memref<1x1x484xf32, #tpu.memory_space<vmem>>, %arg2: memref<1x352xf32, #tpu.memory_space<vmem>>, %arg3: memref<32x32xbf16, #tpu.memory_space<vmem>>, %arg4: memref<32x1xf32, #tpu.memory_space<vmem>>, %arg5: memref<32x160xbf16, #tpu.memory_space<vmem>>, %arg6: memref<32x1xf32, #tpu.memory_space<vmem>>, %arg7: memref<12x32xbf16, #tpu.memory_space<vmem>>, %arg8: memref<12x1xf32, #tpu.memory_space<vmem>>, %arg9: memref<1x1x352xf32, #tpu.memory_space<vmem>>, %arg10: memref<1x1x352xf32, #tpu.memory_space<vmem>>, %arg11: memref<32x421xbf16, #tpu.memory_space<vmem>>, %arg12: memref<32x352xf32, #tpu.memory_space<vmem>>, %arg13: memref<160x352xbf16, #tpu.memory_space<vmem>>) attributes {dimension_semantics = [#tpu.dimension_semantics<parallel>], iteration_bounds = array<i64: 2>, scalar_prefetch = 0 : i64, scratch_operands = 3 : i64, tpu.core_type = #tpu.core_type<tc>, window_params = [{transform_indices = @transform_0, window_bounds = array<i64: 1, 1, 484>}, {pipeline_mode = #tpu.pipeline_mode<synchronous>, transform_indices = @transform_1, window_bounds = array<i64: 1, 352>}, {pipeline_mode = #tpu.pipeline_mode<synchronous>, transform_indices = @transform_2, window_bounds = array<i64: 32, 32>}, {pipeline_mode = #tpu.pipeline_mode<synchronous>, transform_indices = @transform_3, window_bounds = array<i64: 32, 1>}, {pipeline_mode = #tpu.pipeline_mode<synchronous>, transform_indices = @transform_4, window_bounds = array<i64: 32, 160>}, {pipeline_mode = #tpu.pipeline_mode<synchronous>, transform_indices = @transform_5, window_bounds = array<i64: 32, 1>}, {pipeline_mode = #tpu.pipeline_mode<synchronous>, transform_indices = @transform_6, window_bounds = array<i64: 12, 32>}, {pipeline_mode = #tpu.pipeline_mode<synchronous>, transform_indices = @transform_7, window_bounds = array<i64: 12, 1>}, {transform_indices = @transform_8, window_bounds = array<i64: 1, 1, 352>}, {transform_indices = @transform_9, window_bounds = array<i64: 1, 1, 352>}]} {
    %c0 = arith.constant 0 : index
    %c0_0 = arith.constant 0 : index
    %c0_1 = arith.constant 0 : index
    %0 = vector.load %arg1[%c0, %c0_0, %c0_1] : memref<1x1x484xf32, #tpu.memory_space<vmem>>, vector<1x1x352xf32>
    %1 = vector.shape_cast %0 : vector<1x1x352xf32> to vector<1x352xf32>
    %c0_2 = arith.constant 0 : index
    %c0_3 = arith.constant 0 : index
    %2 = vector.load %arg12[%c0_2, %c0_3] : memref<32x352xf32, #tpu.memory_space<vmem>>, vector<1x352xf32>
    tpu.vector_store %arg12[%c0_2, %c0_3], %1 {strides = array<i32>} : memref<32x352xf32, #tpu.memory_space<vmem>>, vector<1x352xf32>,
    %c0_4 = arith.constant 0 : index
    %c0_5 = arith.constant 0 : index
    %c1 = arith.constant 1 : index
    %3 = vector.load %arg1[%c0_4, %c0_5, %c1] : memref<1x1x484xf32, #tpu.memory_space<vmem>>, vector<1x1x352xf32>
    %4 = vector.shape_cast %3 : vector<1x1x352xf32> to vector<1x352xf32>
    %c1_6 = arith.constant 1 : index
    %c0_7 = arith.constant 0 : index
    %5 = vector.load %arg12[%c1_6, %c0_7] : memref<32x352xf32, #tpu.memory_space<vmem>>, vector<1x352xf32>
    tpu.vector_store %arg12[%c1_6, %c0_7], %4 {strides = array<i32>} : memref<32x352xf32, #tpu.memory_space<vmem>>, vector<1x352xf32>,
    %c0_8 = arith.constant 0 : index
    %c0_9 = arith.constant 0 : index
    %c2 = arith.constant 2 : index
    %6 = vector.load %arg1[%c0_8, %c0_9, %c2] : memref<1x1x484xf32, #tpu.memory_space<vmem>>, vector<1x1x352xf32>
    %7 = vector.shape_cast %6 : vector<1x1x352xf32> to vector<1x352xf32>
    %c2_10 = arith.constant 2 : index
    %c0_11 = arith.constant 0 : index
    %8 = vector.load %arg12[%c2_10, %c0_11] : memref<32x352xf32, #tpu.memory_space<vmem>>, vector<1x352xf32>
    tpu.vector_store %arg12[%c2_10, %c0_11], %7 {strides = array<i32>} : memref<32x352xf32, #tpu.memory_space<vmem>>, vector<1x352xf32>,
    %c0_12 = arith.constant 0 : index
    %c0_13 = arith.constant 0 : index
    %c3 = arith.constant 3 : index
    %9 = vector.load %arg1[%c0_12, %c0_13, %c3] : memref<1x1x484xf32, #tpu.memory_space<vmem>>, vector<1x1x352xf32>
    %10 = vector.shape_cast %9 : vector<1x1x352xf32> to vector<1x352xf32>
    %c3_14 = arith.constant 3 : index
    %c0_15 = arith.constant 0 : index
    %11 = vector.load %arg12[%c3_14, %c0_15] : memref<32x352xf32, #tpu.memory_space<vmem>>, vector<1x352xf32>
    tpu.vector_store %arg12[%c3_14, %c0_15], %10 {strides = array<i32>} : memref<32x352xf32, #tpu.memory_space<vmem>>, vector<1x352xf32>,
    %c0_16 = arith.constant 0 : index
    %c0_17 = arith.constant 0 : index
    %c4 = arith.constant 4 : index
    %12 = vector.load %arg1[%c0_16, %c0_17, %c4] : memref<1x1x484xf32, #tpu.memory_space<vmem>>, vector<1x1x352xf32>
    %13 = vector.shape_cast %12 : vector<1x1x352xf32> to vector<1x352xf32>
    %c4_18 = arith.constant 4 : index
    %c0_19 = arith.constant 0 : index
    %14 = vector.load %arg12[%c4_18, %c0_19] : memref<32x352xf32, #tpu.memory_space<vmem>>, vector<1x352xf32>
    tpu.vector_store %arg12[%c4_18, %c0_19], %13 {strides = array<i32>} : memref<32x352xf32, #tpu.memory_space<vmem>>, vector<1x352xf32>,
    %c0_20 = arith.constant 0 : index
    %c0_21 = arith.constant 0 : index
    %c5 = arith.constant 5 : index
    %15 = vector.load %arg1[%c0_20, %c0_21, %c5] : memref<1x1x484xf32, #tpu.memory_space<vmem>>, vector<1x1x352xf32>
    %16 = vector.shape_cast %15 : vector<1x1x352xf32> to vector<1x352xf32>
    %c5_22 = arith.constant 5 : index
    %c0_23 = arith.constant 0 : index
    %17 = vector.load %arg12[%c5_22, %c0_23] : memref<32x352xf32, #tpu.memory_space<vmem>>, vector<1x352xf32>
    tpu.vector_store %arg12[%c5_22, %c0_23], %16 {strides = array<i32>} : memref<32x352xf32, #tpu.memory_space<vmem>>, vector<1x352xf32>,
    %c0_24 = arith.constant 0 : index
    %c0_25 = arith.constant 0 : index
    %c6 = arith.constant 6 : index
    %18 = vector.load %arg1[%c0_24, %c0_25, %c6] : memref<1x1x484xf32, #tpu.memory_space<vmem>>, vector<1x1x352xf32>
    %19 = vector.shape_cast %18 : vector<1x1x352xf32> to vector<1x352xf32>
    %c6_26 = arith.constant 6 : index
    %c0_27 = arith.constant 0 : index
    %20 = vector.load %arg12[%c6_26, %c0_27] : memref<32x352xf32, #tpu.memory_space<vmem>>, vector<1x352xf32>
    tpu.vector_store %arg12[%c6_26, %c0_27], %19 {strides = array<i32>} : memref<32x352xf32, #tpu.memory_space<vmem>>, vector<1x352xf32>,
    %c0_28 = arith.constant 0 : index
    %c0_29 = arith.constant 0 : index
    %c22 = arith.constant 22 : index
    %21 = vector.load %arg1[%c0_28, %c0_29, %c22] : memref<1x1x484xf32, #tpu.memory_space<vmem>>, vector<1x1x352xf32>
    %22 = vector.shape_cast %21 : vector<1x1x352xf32> to vector<1x352xf32>
    %c7 = arith.constant 7 : index
    %c0_30 = arith.constant 0 : index
    %23 = vector.load %arg12[%c7, %c0_30] : memref<32x352xf32, #tpu.memory_space<vmem>>, vector<1x352xf32>
    tpu.vector_store %arg12[%c7, %c0_30], %22 {strides = array<i32>} : memref<32x352xf32, #tpu.memory_space<vmem>>, vector<1x352xf32>,
    %c0_31 = arith.constant 0 : index
    %c0_32 = arith.constant 0 : index
    %c23 = arith.constant 23 : index
    %24 = vector.load %arg1[%c0_31, %c0_32, %c23] : memref<1x1x484xf32, #tpu.memory_space<vmem>>, vector<1x1x352xf32>
    %25 = vector.shape_cast %24 : vector<1x1x352xf32> to vector<1x352xf32>
    %c8 = arith.constant 8 : index
    %c0_33 = arith.constant 0 : index
    %26 = vector.load %arg12[%c8, %c0_33] : memref<32x352xf32, #tpu.memory_space<vmem>>, vector<1x352xf32>
    tpu.vector_store %arg12[%c8, %c0_33], %25 {strides = array<i32>} : memref<32x352xf32, #tpu.memory_space<vmem>>, vector<1x352xf32>,
    %c0_34 = arith.constant 0 : index
    %c0_35 = arith.constant 0 : index
    %c24 = arith.constant 24 : index
    %27 = vector.load %arg1[%c0_34, %c0_35, %c24] : memref<1x1x484xf32, #tpu.memory_space<vmem>>, vector<1x1x352xf32>
    %28 = vector.shape_cast %27 : vector<1x1x352xf32> to vector<1x352xf32>
    %c9 = arith.constant 9 : index
    %c0_36 = arith.constant 0 : index
    %29 = vector.load %arg12[%c9, %c0_36] : memref<32x352xf32, #tpu.memory_space<vmem>>, vector<1x352xf32>
    tpu.vector_store %arg12[%c9, %c0_36], %28 {strides = array<i32>} : memref<32x352xf32, #tpu.memory_space<vmem>>, vector<1x352xf32>,
    %c0_37 = arith.constant 0 : index
    %c0_38 = arith.constant 0 : index
    %c25 = arith.constant 25 : index
    %30 = vector.load %arg1[%c0_37, %c0_38, %c25] : memref<1x1x484xf32, #tpu.memory_space<vmem>>, vector<1x1x352xf32>
    %31 = vector.shape_cast %30 : vector<1x1x352xf32> to vector<1x352xf32>
    %c10 = arith.constant 10 : index
    %c0_39 = arith.constant 0 : index
    %32 = vector.load %arg12[%c10, %c0_39] : memref<32x352xf32, #tpu.memory_space<vmem>>, vector<1x352xf32>
    tpu.vector_store %arg12[%c10, %c0_39], %31 {strides = array<i32>} : memref<32x352xf32, #tpu.memory_space<vmem>>, vector<1x352xf32>,
    %c0_40 = arith.constant 0 : index
    %c0_41 = arith.constant 0 : index
    %c26 = arith.constant 26 : index
    %33 = vector.load %arg1[%c0_40, %c0_41, %c26] : memref<1x1x484xf32, #tpu.memory_space<vmem>>, vector<1x1x352xf32>
    %34 = vector.shape_cast %33 : vector<1x1x352xf32> to vector<1x352xf32>
    %c11 = arith.constant 11 : index
    %c0_42 = arith.constant 0 : index
    %35 = vector.load %arg12[%c11, %c0_42] : memref<32x352xf32, #tpu.memory_space<vmem>>, vector<1x352xf32>
    tpu.vector_store %arg12[%c11, %c0_42], %34 {strides = array<i32>} : memref<32x352xf32, #tpu.memory_space<vmem>>, vector<1x352xf32>,
    %c0_43 = arith.constant 0 : index
    %c0_44 = arith.constant 0 : index
    %c27 = arith.constant 27 : index
    %36 = vector.load %arg1[%c0_43, %c0_44, %c27] : memref<1x1x484xf32, #tpu.memory_space<vmem>>, vector<1x1x352xf32>
    %37 = vector.shape_cast %36 : vector<1x1x352xf32> to vector<1x352xf32>
    %c12 = arith.constant 12 : index
    %c0_45 = arith.constant 0 : index
    %38 = vector.load %arg12[%c12, %c0_45] : memref<32x352xf32, #tpu.memory_space<vmem>>, vector<1x352xf32>
    tpu.vector_store %arg12[%c12, %c0_45], %37 {strides = array<i32>} : memref<32x352xf32, #tpu.memory_space<vmem>>, vector<1x352xf32>,
    %c0_46 = arith.constant 0 : index
    %c0_47 = arith.constant 0 : index
    %c28 = arith.constant 28 : index
    %39 = vector.load %arg1[%c0_46, %c0_47, %c28] : memref<1x1x484xf32, #tpu.memory_space<vmem>>, vector<1x1x352xf32>
    %40 = vector.shape_cast %39 : vector<1x1x352xf32> to vector<1x352xf32>
    %c13 = arith.constant 13 : index
    %c0_48 = arith.constant 0 : index
    %41 = vector.load %arg12[%c13, %c0_48] : memref<32x352xf32, #tpu.memory_space<vmem>>, vector<1x352xf32>
    tpu.vector_store %arg12[%c13, %c0_48], %40 {strides = array<i32>} : memref<32x352xf32, #tpu.memory_space<vmem>>, vector<1x352xf32>,
    %c0_49 = arith.constant 0 : index
    %c0_50 = arith.constant 0 : index
    %c44 = arith.constant 44 : index
    %42 = vector.load %arg1[%c0_49, %c0_50, %c44] : memref<1x1x484xf32, #tpu.memory_space<vmem>>, vector<1x1x352xf32>
    %43 = vector.shape_cast %42 : vector<1x1x352xf32> to vector<1x352xf32>
    %c14 = arith.constant 14 : index
    %c0_51 = arith.constant 0 : index
    %44 = vector.load %arg12[%c14, %c0_51] : memref<32x352xf32, #tpu.memory_space<vmem>>, vector<1x352xf32>
    tpu.vector_store %arg12[%c14, %c0_51], %43 {strides = array<i32>} : memref<32x352xf32, #tpu.memory_space<vmem>>, vector<1x352xf32>,
    %c0_52 = arith.constant 0 : index
    %c0_53 = arith.constant 0 : index
    %c45 = arith.constant 45 : index
    %45 = vector.load %arg1[%c0_52, %c0_53, %c45] : memref<1x1x484xf32, #tpu.memory_space<vmem>>, vector<1x1x352xf32>
    %46 = vector.shape_cast %45 : vector<1x1x352xf32> to vector<1x352xf32>
    %c15 = arith.constant 15 : index
    %c0_54 = arith.constant 0 : index
    %47 = vector.load %arg12[%c15, %c0_54] : memref<32x352xf32, #tpu.memory_space<vmem>>, vector<1x352xf32>
    tpu.vector_store %arg12[%c15, %c0_54], %46 {strides = array<i32>} : memref<32x352xf32, #tpu.memory_space<vmem>>, vector<1x352xf32>,
    %c0_55 = arith.constant 0 : index
    %c0_56 = arith.constant 0 : index
    %c46 = arith.constant 46 : index
    %48 = vector.load %arg1[%c0_55, %c0_56, %c46] : memref<1x1x484xf32, #tpu.memory_space<vmem>>, vector<1x1x352xf32>
    %49 = vector.shape_cast %48 : vector<1x1x352xf32> to vector<1x352xf32>
    %c16 = arith.constant 16 : index
    %c0_57 = arith.constant 0 : index
    %50 = vector.load %arg12[%c16, %c0_57] : memref<32x352xf32, #tpu.memory_space<vmem>>, vector<1x352xf32>
    tpu.vector_store %arg12[%c16, %c0_57], %49 {strides = array<i32>} : memref<32x352xf32, #tpu.memory_space<vmem>>, vector<1x352xf32>,
    %c0_58 = arith.constant 0 : index
    %c0_59 = arith.constant 0 : index
    %c47 = arith.constant 47 : index
    %51 = vector.load %arg1[%c0_58, %c0_59, %c47] : memref<1x1x484xf32, #tpu.memory_space<vmem>>, vector<1x1x352xf32>
    %52 = vector.shape_cast %51 : vector<1x1x352xf32> to vector<1x352xf32>
    %c17 = arith.constant 17 : index
    %c0_60 = arith.constant 0 : index
    %53 = vector.load %arg12[%c17, %c0_60] : memref<32x352xf32, #tpu.memory_space<vmem>>, vector<1x352xf32>
    tpu.vector_store %arg12[%c17, %c0_60], %52 {strides = array<i32>} : memref<32x352xf32, #tpu.memory_space<vmem>>, vector<1x352xf32>,
    %c0_61 = arith.constant 0 : index
    %c0_62 = arith.constant 0 : index
    %c48 = arith.constant 48 : index
    %54 = vector.load %arg1[%c0_61, %c0_62, %c48] : memref<1x1x484xf32, #tpu.memory_space<vmem>>, vector<1x1x352xf32>
    %55 = vector.shape_cast %54 : vector<1x1x352xf32> to vector<1x352xf32>
    %c18 = arith.constant 18 : index
    %c0_63 = arith.constant 0 : index
    %56 = vector.load %arg12[%c18, %c0_63] : memref<32x352xf32, #tpu.memory_space<vmem>>, vector<1x352xf32>
    tpu.vector_store %arg12[%c18, %c0_63], %55 {strides = array<i32>} : memref<32x352xf32, #tpu.memory_space<vmem>>, vector<1x352xf32>,
    %c0_64 = arith.constant 0 : index
    %c0_65 = arith.constant 0 : index
    %c49 = arith.constant 49 : index
    %57 = vector.load %arg1[%c0_64, %c0_65, %c49] : memref<1x1x484xf32, #tpu.memory_space<vmem>>, vector<1x1x352xf32>
    %58 = vector.shape_cast %57 : vector<1x1x352xf32> to vector<1x352xf32>
    %c19 = arith.constant 19 : index
    %c0_66 = arith.constant 0 : index
    %59 = vector.load %arg12[%c19, %c0_66] : memref<32x352xf32, #tpu.memory_space<vmem>>, vector<1x352xf32>
    tpu.vector_store %arg12[%c19, %c0_66], %58 {strides = array<i32>} : memref<32x352xf32, #tpu.memory_space<vmem>>, vector<1x352xf32>,
    %c0_67 = arith.constant 0 : index
    %c0_68 = arith.constant 0 : index
    %c50 = arith.constant 50 : index
    %60 = vector.load %arg1[%c0_67, %c0_68, %c50] : memref<1x1x484xf32, #tpu.memory_space<vmem>>, vector<1x1x352xf32>
    %61 = vector.shape_cast %60 : vector<1x1x352xf32> to vector<1x352xf32>
    %c20 = arith.constant 20 : index
    %c0_69 = arith.constant 0 : index
    %62 = vector.load %arg12[%c20, %c0_69] : memref<32x352xf32, #tpu.memory_space<vmem>>, vector<1x352xf32>
    tpu.vector_store %arg12[%c20, %c0_69], %61 {strides = array<i32>} : memref<32x352xf32, #tpu.memory_space<vmem>>, vector<1x352xf32>,
    %c0_70 = arith.constant 0 : index
    %c0_71 = arith.constant 0 : index
    %c66 = arith.constant 66 : index
    %63 = vector.load %arg1[%c0_70, %c0_71, %c66] : memref<1x1x484xf32, #tpu.memory_space<vmem>>, vector<1x1x352xf32>
    %64 = vector.shape_cast %63 : vector<1x1x352xf32> to vector<1x352xf32>
    %c21 = arith.constant 21 : index
    %c0_72 = arith.constant 0 : index
    %65 = vector.load %arg12[%c21, %c0_72] : memref<32x352xf32, #tpu.memory_space<vmem>>, vector<1x352xf32>
    tpu.vector_store %arg12[%c21, %c0_72], %64 {strides = array<i32>} : memref<32x352xf32, #tpu.memory_space<vmem>>, vector<1x352xf32>,
    %c0_73 = arith.constant 0 : index
    %c0_74 = arith.constant 0 : index
    %c67 = arith.constant 67 : index
    %66 = vector.load %arg1[%c0_73, %c0_74, %c67] : memref<1x1x484xf32, #tpu.memory_space<vmem>>, vector<1x1x352xf32>
    %67 = vector.shape_cast %66 : vector<1x1x352xf32> to vector<1x352xf32>
    %c22_75 = arith.constant 22 : index
    %c0_76 = arith.constant 0 : index
    %68 = vector.load %arg12[%c22_75, %c0_76] : memref<32x352xf32, #tpu.memory_space<vmem>>, vector<1x352xf32>
    tpu.vector_store %arg12[%c22_75, %c0_76], %67 {strides = array<i32>} : memref<32x352xf32, #tpu.memory_space<vmem>>, vector<1x352xf32>,
    %c0_77 = arith.constant 0 : index
    %c0_78 = arith.constant 0 : index
    %c68 = arith.constant 68 : index
    %69 = vector.load %arg1[%c0_77, %c0_78, %c68] : memref<1x1x484xf32, #tpu.memory_space<vmem>>, vector<1x1x352xf32>
    %70 = vector.shape_cast %69 : vector<1x1x352xf32> to vector<1x352xf32>
    %c23_79 = arith.constant 23 : index
    %c0_80 = arith.constant 0 : index
    %71 = vector.load %arg12[%c23_79, %c0_80] : memref<32x352xf32, #tpu.memory_space<vmem>>, vector<1x352xf32>
    tpu.vector_store %arg12[%c23_79, %c0_80], %70 {strides = array<i32>} : memref<32x352xf32, #tpu.memory_space<vmem>>, vector<1x352xf32>,
    %cst = arith.constant 0.000000e+00 : f32
    %72 = vector.broadcast %cst : f32 to vector<8x352xf32>
    %c24_81 = arith.constant 24 : index
    %c0_82 = arith.constant 0 : index
    %73 = vector.load %arg12[%c24_81, %c0_82] : memref<32x352xf32, #tpu.memory_space<vmem>>, vector<8x352xf32>
    tpu.vector_store %arg12[%c24_81, %c0_82], %72 {strides = array<i32>} : memref<32x352xf32, #tpu.memory_space<vmem>>, vector<8x352xf32>,
    %c0_83 = arith.constant 0 : index
    %c0_84 = arith.constant 0 : index
    %74 = vector.load %arg3[%c0_83, %c0_84] : memref<32x32xbf16, #tpu.memory_space<vmem>>, vector<32x32xbf16>
    %c0_85 = arith.constant 0 : index
    %c0_86 = arith.constant 0 : index
    %75 = vector.load %arg12[%c0_85, %c0_86] : memref<32x352xf32, #tpu.memory_space<vmem>>, vector<32x352xf32>
    %76 = arith.truncf %75 : vector<32x352xf32> to vector<32x352xbf16>
    %cst_87 = arith.constant dense<0.000000e+00> : vector<32x352xf32>
    %77 = tpu.matmul %74, %76, %cst_87 {dimension_numbers = #tpu.dot_dimension_numbers<[1], [0], [0], [1], [0, 0, 1, 1], [], []>} : vector<32x32xbf16>, vector<32x352xbf16>, vector<32x352xf32> -> vector<32x352xf32>
    %c0_88 = arith.constant 0 : index
    %c0_89 = arith.constant 0 : index
    %78 = vector.load %arg4[%c0_88, %c0_89] : memref<32x1xf32, #tpu.memory_space<vmem>>, vector<32x1xf32>
    %79 = vector.broadcast %78 : vector<32x1xf32> to vector<32x352xf32>
    %80 = arith.addf %77, %79 : vector<32x352xf32>
    %cst_90 = arith.constant 0.000000e+00 : f32
    %81 = vector.broadcast %cst_90 : f32 to vector<32x352xf32>
    %82 = arith.maximumf %80, %81 : vector<32x352xf32>
    %c0_91 = arith.constant 0 : index
    %c0_92 = arith.constant 0 : index
    %83 = vector.load %arg2[%c0_91, %c0_92] : memref<1x352xf32, #tpu.memory_space<vmem>>, vector<1x352xf32>
    %84 = vector.broadcast %83 : vector<1x352xf32> to vector<32x352xf32>
    %85 = arith.mulf %82, %84 : vector<32x352xf32>
    %cst_93 = arith.constant 0.000000e+00 : bf16
    %86 = vector.broadcast %cst_93 : bf16 to vector<32x69xbf16>
    %c0_94 = arith.constant 0 : index
    %c0_95 = arith.constant 0 : index
    %87 = vector.load %arg11[%c0_94, %c0_95] : memref<32x421xbf16, #tpu.memory_space<vmem>>, vector<32x69xbf16>
    tpu.vector_store %arg11[%c0_94, %c0_95], %86 {strides = array<i32>} : memref<32x421xbf16, #tpu.memory_space<vmem>>, vector<32x69xbf16>,
    %88 = arith.truncf %85 : vector<32x352xf32> to vector<32x352xbf16>
    %c0_96 = arith.constant 0 : index
    %c69 = arith.constant 69 : index
    %89 = vector.load %arg11[%c0_96, %c69] : memref<32x421xbf16, #tpu.memory_space<vmem>>, vector<32x352xbf16>
    tpu.vector_store %arg11[%c0_96, %c69], %88 {strides = array<i32>} : memref<32x421xbf16, #tpu.memory_space<vmem>>, vector<32x352xbf16>,
    %c0_97 = arith.constant 0 : index
    %c46_98 = arith.constant 46 : index
    %90 = vector.load %arg11[%c0_97, %c46_98] : memref<32x421xbf16, #tpu.memory_space<vmem>>, vector<32x352xbf16>
    %c0_99 = arith.constant 0 : index
    %c0_100 = arith.constant 0 : index
    %91 = vector.load %arg13[%c0_99, %c0_100] : memref<160x352xbf16, #tpu.memory_space<vmem>>, vector<32x352xbf16>
    tpu.vector_store %arg13[%c0_99, %c0_100], %90 {strides = array<i32>} : memref<160x352xbf16, #tpu.memory_space<vmem>>, vector<32x352xbf16>,
    %c0_101 = arith.constant 0 : index
    %c47_102 = arith.constant 47 : index
    %92 = vector.load %arg11[%c0_101, %c47_102] : memref<32x421xbf16, #tpu.memory_space<vmem>>, vector<32x352xbf16>
    %c32 = arith.constant 32 : index
    %c0_103 = arith.constant 0 : index
    %93 = vector.load %arg13[%c32, %c0_103] : memref<160x352xbf16, #tpu.memory_space<vmem>>, vector<32x352xbf16>
    tpu.vector_store %arg13[%c32, %c0_103], %92 {strides = array<i32>} : memref<160x352xbf16, #tpu.memory_space<vmem>>, vector<32x352xbf16>,
    %c0_104 = arith.constant 0 : index
    %c48_105 = arith.constant 48 : index
    %94 = vector.load %arg11[%c0_104, %c48_105] : memref<32x421xbf16, #tpu.memory_space<vmem>>, vector<32x352xbf16>
    %c64 = arith.constant 64 : index
    %c0_106 = arith.constant 0 : index
    %95 = vector.load %arg13[%c64, %c0_106] : memref<160x352xbf16, #tpu.memory_space<vmem>>, vector<32x352xbf16>
    tpu.vector_store %arg13[%c64, %c0_106], %94 {strides = array<i32>} : memref<160x352xbf16, #tpu.memory_space<vmem>>, vector<32x352xbf16>,
    %c0_107 = arith.constant 0 : index
    %c68_108 = arith.constant 68 : index
    %96 = vector.load %arg11[%c0_107, %c68_108] : memref<32x421xbf16, #tpu.memory_space<vmem>>, vector<32x352xbf16>
    %c96 = arith.constant 96 : index
    %c0_109 = arith.constant 0 : index
    %97 = vector.load %arg13[%c96, %c0_109] : memref<160x352xbf16, #tpu.memory_space<vmem>>, vector<32x352xbf16>
    tpu.vector_store %arg13[%c96, %c0_109], %96 {strides = array<i32>} : memref<160x352xbf16, #tpu.memory_space<vmem>>, vector<32x352xbf16>,
    %c0_110 = arith.constant 0 : index
    %c69_111 = arith.constant 69 : index
    %98 = vector.load %arg11[%c0_110, %c69_111] : memref<32x421xbf16, #tpu.memory_space<vmem>>, vector<32x352xbf16>
    %c128 = arith.constant 128 : index
    %c0_112 = arith.constant 0 : index
    %99 = vector.load %arg13[%c128, %c0_112] : memref<160x352xbf16, #tpu.memory_space<vmem>>, vector<32x352xbf16>
    tpu.vector_store %arg13[%c128, %c0_112], %98 {strides = array<i32>} : memref<160x352xbf16, #tpu.memory_space<vmem>>, vector<32x352xbf16>,
    %c0_113 = arith.constant 0 : index
    %c0_114 = arith.constant 0 : index
    %100 = vector.load %arg5[%c0_113, %c0_114] : memref<32x160xbf16, #tpu.memory_space<vmem>>, vector<32x160xbf16>
    %c0_115 = arith.constant 0 : index
    %c0_116 = arith.constant 0 : index
    %101 = vector.load %arg13[%c0_115, %c0_116] : memref<160x352xbf16, #tpu.memory_space<vmem>>, vector<160x352xbf16>
    %cst_117 = arith.constant dense<0.000000e+00> : vector<32x352xf32>
    %102 = tpu.matmul %100, %101, %cst_117 {dimension_numbers = #tpu.dot_dimension_numbers<[1], [0], [0], [1], [0, 0, 1, 1], [], []>} : vector<32x160xbf16>, vector<160x352xbf16>, vector<32x352xf32> -> vector<32x352xf32>
    %c0_118 = arith.constant 0 : index
    %c0_119 = arith.constant 0 : index
    %103 = vector.load %arg6[%c0_118, %c0_119] : memref<32x1xf32, #tpu.memory_space<vmem>>, vector<32x1xf32>
    %104 = vector.broadcast %103 : vector<32x1xf32> to vector<32x352xf32>
    %105 = arith.addf %102, %104 : vector<32x352xf32>
    %cst_120 = arith.constant 0.000000e+00 : f32
    %106 = vector.broadcast %cst_120 : f32 to vector<32x352xf32>
    %107 = arith.maximumf %105, %106 : vector<32x352xf32>
    %c0_121 = arith.constant 0 : index
    %c0_122 = arith.constant 0 : index
    %108 = vector.load %arg7[%c0_121, %c0_122] : memref<12x32xbf16, #tpu.memory_space<vmem>>, vector<12x32xbf16>
    %109 = arith.truncf %107 : vector<32x352xf32> to vector<32x352xbf16>
    %cst_123 = arith.constant dense<0.000000e+00> : vector<12x352xf32>
    %110 = tpu.matmul %108, %109, %cst_123 {dimension_numbers = #tpu.dot_dimension_numbers<[1], [0], [0], [1], [0, 0, 1, 1], [], []>} : vector<12x32xbf16>, vector<32x352xbf16>, vector<12x352xf32> -> vector<12x352xf32>
    %c0_124 = arith.constant 0 : index
    %c0_125 = arith.constant 0 : index
    %111 = vector.load %arg8[%c0_124, %c0_125] : memref<12x1xf32, #tpu.memory_space<vmem>>, vector<12x1xf32>
    %112 = vector.broadcast %111 : vector<12x1xf32> to vector<12x352xf32>
    %113 = arith.addf %110, %112 : vector<12x352xf32>
    %114 = vector.extract_strided_slice %113 {offsets = [0, 0], sizes = [4, 352], strides = [1, 1]} : vector<12x352xf32> to vector<4x352xf32>
    %115 = vector.shape_cast %114 : vector<4x352xf32> to vector<4x1x352xf32>
    %116 = vector.extract_strided_slice %113 {offsets = [4, 0], sizes = [4, 352], strides = [1, 1]} : vector<12x352xf32> to vector<4x352xf32>
    %117 = vector.shape_cast %116 : vector<4x352xf32> to vector<4x1x352xf32>
    %118 = vector.extract_strided_slice %113 {offsets = [8, 0], sizes = [4, 352], strides = [1, 1]} : vector<12x352xf32> to vector<4x352xf32>
    %119 = vector.shape_cast %118 : vector<4x352xf32> to vector<4x1x352xf32>
    %c0_126 = arith.constant 0 : index
    %c0_127 = arith.constant 0 : index
    %c69_128 = arith.constant 69 : index
    %120 = vector.load %arg1[%c0_126, %c0_127, %c69_128] : memref<1x1x484xf32, #tpu.memory_space<vmem>>, vector<1x1x352xf32>
    %121 = vector.shape_cast %120 : vector<1x1x352xf32> to vector<1x352xf32>
    %122 = vector.shape_cast %121 : vector<1x352xf32> to vector<1x1x352xf32>
    %cst_129 = arith.constant dense<0xFF800000> : vector<1x352xf32>
    %123 = vector.multi_reduction <maximumf>, %115, %cst_129 [0] : vector<4x1x352xf32> to vector<1x352xf32>
    %124 = vector.shape_cast %123 : vector<1x352xf32> to vector<1x1x352xf32>
    %125 = vector.broadcast %124 : vector<1x1x352xf32> to vector<4x1x352xf32>
    %126 = arith.subf %115, %125 : vector<4x1x352xf32>
    %127 = math.exp %126 : vector<4x1x352xf32>
    %cst_130 = arith.constant dense<0.000000e+00> : vector<1x352xf32>
    %128 = vector.multi_reduction <add>, %127, %cst_130 [0] : vector<4x1x352xf32> to vector<1x352xf32>
    %129 = vector.shape_cast %128 : vector<1x352xf32> to vector<1x1x352xf32>
    %130 = vector.broadcast %129 : vector<1x1x352xf32> to vector<4x1x352xf32>
    %131 = arith.divf %127, %130 : vector<4x1x352xf32>
    %cst_131 = arith.constant 0.000000e+00 : f32
    %132 = vector.broadcast %cst_131 : f32 to vector<4x1x352xf32>
    %133 = arith.subf %132, %119 : vector<4x1x352xf32>
    %134 = math.exp %133 : vector<4x1x352xf32>
    %135 = vector.broadcast %122 : vector<1x1x352xf32> to vector<4x1x352xf32>
    %136 = arith.subf %135, %117 : vector<4x1x352xf32>
    %137 = arith.mulf %136, %134 : vector<4x1x352xf32>
    %cst_132 = arith.constant 0.707106769 : f32
    %138 = vector.broadcast %cst_132 : f32 to vector<4x1x352xf32>
    %139 = arith.mulf %137, %138 : vector<4x1x352xf32>
    %140 = math.erf %139 : vector<4x1x352xf32>
    %cst_133 = arith.constant 1.000000e+00 : f32
    %141 = vector.broadcast %cst_133 : f32 to vector<4x1x352xf32>
    %142 = arith.addf %141, %140 : vector<4x1x352xf32>
    %cst_134 = arith.constant 5.000000e-01 : f32
    %143 = vector.broadcast %cst_134 : f32 to vector<4x1x352xf32>
    %144 = arith.mulf %143, %142 : vector<4x1x352xf32>
    %145 = arith.mulf %137, %137 : vector<4x1x352xf32>
    %cst_135 = arith.constant -5.000000e-01 : f32
    %146 = vector.broadcast %cst_135 : f32 to vector<4x1x352xf32>
    %147 = arith.mulf %146, %145 : vector<4x1x352xf32>
    %148 = math.exp %147 : vector<4x1x352xf32>
    %cst_136 = arith.constant 0.398942292 : f32
    %149 = vector.broadcast %cst_136 : f32 to vector<4x1x352xf32>
    %150 = arith.mulf %149, %134 : vector<4x1x352xf32>
    %151 = arith.mulf %148, %150 : vector<4x1x352xf32>
    %152 = arith.mulf %131, %144 : vector<4x1x352xf32>
    %cst_137 = arith.constant dense<0.000000e+00> : vector<1x352xf32>
    %153 = vector.multi_reduction <add>, %152, %cst_137 [0] : vector<4x1x352xf32> to vector<1x352xf32>
    %cst_138 = arith.constant 0.000000e+00 : f32
    %cst_139 = arith.constant 1.000000e+00 : f32
    %154 = vector.broadcast %cst_138 : f32 to vector<1x352xf32>
    %155 = arith.maximumf %154, %153 : vector<1x352xf32>
    %156 = vector.broadcast %cst_139 : f32 to vector<1x352xf32>
    %157 = arith.minimumf %156, %155 : vector<1x352xf32>
    %c0_140 = arith.constant 0 : index
    %c0_141 = arith.constant 0 : index
    %c0_142 = arith.constant 0 : index
    %158 = vector.load %arg9[%c0_140, %c0_141, %c0_142] : memref<1x1x352xf32, #tpu.memory_space<vmem>>, vector<1x1x352xf32>
    %159 = vector.shape_cast %158 : vector<1x1x352xf32> to vector<1x352xf32>
    %160 = vector.shape_cast %157 : vector<1x352xf32> to vector<1x1x352xf32>
    tpu.vector_store %arg9[%c0_140, %c0_141, %c0_142], %160 {strides = array<i32>} : memref<1x1x352xf32, #tpu.memory_space<vmem>>, vector<1x1x352xf32>,
    %161 = arith.mulf %131, %151 : vector<4x1x352xf32>
    %cst_143 = arith.constant dense<0.000000e+00> : vector<1x352xf32>
    %162 = vector.multi_reduction <add>, %161, %cst_143 [0] : vector<4x1x352xf32> to vector<1x352xf32>
    %163 = math.log %162 : vector<1x352xf32>
    %cst_144 = arith.constant 0.693147182 : f32
    %164 = vector.broadcast %cst_144 : f32 to vector<1x352xf32>
    %165 = arith.subf %163, %164 : vector<1x352xf32>
    %c0_145 = arith.constant 0 : index
    %c0_146 = arith.constant 0 : index
    %c0_147 = arith.constant 0 : index
    %166 = vector.load %arg10[%c0_145, %c0_146, %c0_147] : memref<1x1x352xf32, #tpu.memory_space<vmem>>, vector<1x1x352xf32>
    %167 = vector.shape_cast %166 : vector<1x1x352xf32> to vector<1x352xf32>
    %168 = vector.shape_cast %165 : vector<1x352xf32> to vector<1x1x352xf32>
    tpu.vector_store %arg10[%c0_145, %c0_146, %c0_147], %168 {strides = array<i32>} : memref<1x1x352xf32, #tpu.memory_space<vmem>>, vector<1x1x352xf32>,
    return
  }
  func.func @transform_0(%arg0: i32) -> (i32, i32, i32) {
    %c0_i32 = arith.constant 0 : i32
    %c0_i32_0 = arith.constant 0 : i32
    %c0_i32_1 = arith.constant 0 : i32
    return %arg0, %c0_i32, %c0_i32_0 : i32, i32, i32
  }
  func.func @transform_1(%arg0: i32) -> (i32, i32) {
    %c0_i32 = arith.constant 0 : i32
    %c0_i32_0 = arith.constant 0 : i32
    %c0_i32_1 = arith.constant 0 : i32
    return %c0_i32, %c0_i32_0 : i32, i32
  }
  func.func @transform_2(%arg0: i32) -> (i32, i32) {
    %c0_i32 = arith.constant 0 : i32
    %c0_i32_0 = arith.constant 0 : i32
    %c0_i32_1 = arith.constant 0 : i32
    return %c0_i32, %c0_i32_0 : i32, i32
  }
  func.func @transform_3(%arg0: i32) -> (i32, i32) {
    %c0_i32 = arith.constant 0 : i32
    %c0_i32_0 = arith.constant 0 : i32
    %c0_i32_1 = arith.constant 0 : i32
    return %c0_i32, %c0_i32_0 : i32, i32
  }
  func.func @transform_4(%arg0: i32) -> (i32, i32) {
    %c0_i32 = arith.constant 0 : i32
    %c0_i32_0 = arith.constant 0 : i32
    %c0_i32_1 = arith.constant 0 : i32
    return %c0_i32, %c0_i32_0 : i32, i32
  }
  func.func @transform_5(%arg0: i32) -> (i32, i32) {
    %c0_i32 = arith.constant 0 : i32
    %c0_i32_0 = arith.constant 0 : i32
    %c0_i32_1 = arith.constant 0 : i32
    return %c0_i32, %c0_i32_0 : i32, i32
  }
  func.func @transform_6(%arg0: i32) -> (i32, i32) {
    %c0_i32 = arith.constant 0 : i32
    %c0_i32_0 = arith.constant 0 : i32
    %c0_i32_1 = arith.constant 0 : i32
    return %c0_i32, %c0_i32_0 : i32, i32
  }
  func.func @transform_7(%arg0: i32) -> (i32, i32) {
    %c0_i32 = arith.constant 0 : i32
    %c0_i32_0 = arith.constant 0 : i32
    %c0_i32_1 = arith.constant 0 : i32
    return %c0_i32, %c0_i32_0 : i32, i32
  }
  func.func @transform_8(%arg0: i32) -> (i32, i32, i32) {
    %c0_i32 = arith.constant 0 : i32
    %c0_i32_0 = arith.constant 0 : i32
    %c0_i32_1 = arith.constant 0 : i32
    return %arg0, %c0_i32, %c0_i32_0 : i32, i32, i32
  }
  func.func @transform_9(%arg0: i32) -> (i32, i32, i32) {
    %c0_i32 = arith.constant 0 : i32
    %c0_i32_0 = arith.constant 0 : i32
    %c0_i32_1 = arith.constant 0 : i32
    return %arg0, %c0_i32, %c0_i32_0 : i32, i32, i32
  }
}

</mosaic_0001>

<llo_original>
// kernel: flow_pixel_cnn_forward.1
$region0: #{flow_pixel_cnn_forward.1}
  #allocation0 [shape = 'u32[]', space=smem, size = 0x4, offset = 0x4, fixed_abs, tag = 'smem constant byte address 0x4 - core index']
  #allocation1 [shape = 'u32[144,128]{1,0:T(1,128)}', space=vmem, size = 0x12000, scoped, tag = 'internal scratch']
  #allocation2 [shape = 'bf16[32,421]{1,0:T(16,128)(2,1)}', space=vmem, size = 0x8000, scoped, tag = 'scratch operand']
  #allocation3 [shape = 'f32[32,352]{1,0:T(8,128)}', space=vmem, size = 0xc000, scoped, tag = 'scratch operand']
  #allocation4 [shape = 'bf16[160,352]{1,0:T(16,128)(2,1)}', space=vmem, size = 0x1e000, scoped, tag = 'scratch operand']
  %s0 = inlined_call_operand.vmem [shape: f32[2,1,484], index: 0, kind: input, shape index: {}]
  %s1 = inlined_call_operand.vmem [shape: f32[1,352], index: 1, kind: input, shape index: {}]
  %s2 = inlined_call_operand.vmem [shape: bf16[32,32], index: 2, kind: input, shape index: {}]
  %s3 = inlined_call_operand.vmem [shape: f32[32,1], index: 3, kind: input, shape index: {}]
  %s4 = inlined_call_operand.vmem [shape: bf16[32,160], index: 4, kind: input, shape index: {}]
  %s5 = inlined_call_operand.vmem [shape: f32[32,1], index: 5, kind: input, shape index: {}]
  %s6 = inlined_call_operand.vmem [shape: bf16[12,32], index: 6, kind: input, shape index: {}]
  %s7 = inlined_call_operand.vmem [shape: f32[12,1], index: 7, kind: input, shape index: {}]
  %s8 = inlined_call_operand.vmem [shape: f32[2,1,352], index: 8, kind: output, shape index: {0}]
  %s9 = inlined_call_operand.vmem [shape: f32[2,1,352], index: 9, kind: output, shape index: {1}]
  %10 = xla_tuple %s8, %s9
  %s11 = sld [smem:[#allocation0]]
  $region73: #{flow_pixel_cnn_forward.1} parent=0
    _
  %s13 = ssub.s32 1, %s11
  %s14 = scalar_select 0, %s13, %s11
  loop: start=0, step=1, limit=4
  $region2: #{flow_pixel_cnn_forward.1} parent=0 // loop_pre_header
    _
  $region3: #{flow_pixel_cnn_forward.1} parent=0 // loop_header
    %s16 = sphi 0, %s20
    %p17 = scmp.ge.s32.totalorder %s16, 4
    %s26 = sphi 0, %s28
    %s29 = sphi 0, %s26
    %s30 = sphi 0, %s29
    %s46 = sphi 0, %s30
    %s50 = sphi 0, %s50
    %s52 = sphi 0, %s50
    %s53 = sphi 0, %s52
    %s67 = sphi 0, %s53
    %s71 = sphi 0, %s71
    %s73 = sphi 0, %s71
    %s74 = sphi 0, %s73
    %s88 = sphi 0, %s74
    %s92 = sphi 0, %s92
    %s94 = sphi 0, %s92
    %s95 = sphi 0, %s94
    %s109 = sphi 0, %s95
    %s113 = sphi 0, %s113
    %s115 = sphi 0, %s113
    %s116 = sphi 0, %s115
    %s130 = sphi 0, %s116
    %s134 = sphi 0, %s134
    %s136 = sphi 0, %s134
    %s137 = sphi 0, %s136
    %s151 = sphi 0, %s137
    %s155 = sphi 0, %s155
    %s157 = sphi 0, %s155
    %s158 = sphi 0, %s157
    %s172 = sphi 0, %s158
    %s176 = sphi 0, %s176
    %s178 = sphi 0, %s176
    %s179 = sphi 0, %s178
    %s193 = sphi 0, %s179
    %s199 = sphi 0, %s201
    %s202 = sphi 0, %s199
    %s203 = sphi 0, %s202
    %s219 = sphi 0, %s203
    %s225 = sphi 0, %s227
    %s228 = sphi 0, %s225
    %s229 = sphi 0, %s228
    %s245 = sphi 0, %s229
  $region4: #{flow_pixel_cnn_forward.1} parent=0 // loop_header_branch
    %19 = sbr.rel (%p17) target = $region8
  $region5: #{flow_pixel_cnn_forward.1} parent=0 // loop_body
    %s21 = ssub.s32 %s16, 1
    %s22 = ssub.s32 %s16, 2
    %s23 = sadd.s32 %s16, 1
    %s24 = ssub.s32 %s16, %s23
    %p25 = scmp.eq.s32.totalorder %s24, 0
    %s27 = sadd.s32 %s26, 1
    %s28 = scalar_select %p25, %s26, %s27
    %p31 = pneg %p25
    %p32 = scmp.eq.s32.totalorder %s16, 1
    %p33 = por %p31, %p32
    %p34 = scmp.ne.s32.totalorder %s26, %s29
    %p35 = scmp.eq.s32.totalorder %s16, 0
    %p36 = por %p34, %p35
    %p37 = scmp.ne.s32.totalorder %s26, %s29
    %p38 = scmp.eq.s32.totalorder %s21, 1
    %p39 = por %p37, %p38
    %p40 = scmp.ne.s32.totalorder %s29, %s30
    %p41 = scmp.eq.s32.totalorder %s21, 0
    %p42 = por %p40, %p41
    %p43 = scmp.ne.s32.totalorder %s29, %s30
    %p44 = scmp.eq.s32.totalorder %s22, 1
    %p45 = por %p43, %p44
    %p47 = scmp.ne.s32.totalorder %s30, %s46
    %p48 = scmp.eq.s32.totalorder %s22, 0
    %p49 = por %p47, %p48
    %s51 = sadd.s32 %s50, 1
    %p54 = scmp.eq.s32.totalorder %s16, 1
    %p55 = scmp.ne.s32.totalorder %s50, %s52
    %p56 = scmp.eq.s32.totalorder %s16, 0
    %p57 = por %p55, %p56
    %p58 = scmp.ne.s32.totalorder %s50, %s52
    %p59 = scmp.eq.s32.totalorder %s21, 1
    %p60 = por %p58, %p59
    %p61 = scmp.ne.s32.totalorder %s52, %s53
    %p62 = scmp.eq.s32.totalorder %s21, 0
    %p63 = por %p61, %p62
    %p64 = scmp.ne.s32.totalorder %s52, %s53
    %p65 = scmp.eq.s32.totalorder %s22, 1
    %p66 = por %p64, %p65
    %p68 = scmp.ne.s32.totalorder %s53, %s67
    %p69 = scmp.eq.s32.totalorder %s22, 0
    %p70 = por %p68, %p69
    %s72 = sadd.s32 %s71, 1
    %p75 = scmp.eq.s32.totalorder %s16, 1
    %p76 = scmp.ne.s32.totalorder %s71, %s73
    %p77 = scmp.eq.s32.totalorder %s16, 0
    %p78 = por %p76, %p77
    %p79 = scmp.ne.s32.totalorder %s71, %s73
    %p80 = scmp.eq.s32.totalorder %s21, 1
    %p81 = por %p79, %p80
    %p82 = scmp.ne.s32.totalorder %s73, %s74
    %p83 = scmp.eq.s32.totalorder %s21, 0
    %p84 = por %p82, %p83
    %p85 = scmp.ne.s32.totalorder %s73, %s74
    %p86 = scmp.eq.s32.totalorder %s22, 1
    %p87 = por %p85, %p86
    %p89 = scmp.ne.s32.totalorder %s74, %s88
    %p90 = scmp.eq.s32.totalorder %s22, 0
    %p91 = por %p89, %p90
    %s93 = sadd.s32 %s92, 1
    %p96 = scmp.eq.s32.totalorder %s16, 1
    %p97 = scmp.ne.s32.totalorder %s92, %s94
    %p98 = scmp.eq.s32.totalorder %s16, 0
    %p99 = por %p97, %p98
    %p100 = scmp.ne.s32.totalorder %s92, %s94
    %p101 = scmp.eq.s32.totalorder %s21, 1
    %p102 = por %p100, %p101
    %p103 = scmp.ne.s32.totalorder %s94, %s95
    %p104 = scmp.eq.s32.totalorder %s21, 0
    %p105 = por %p103, %p104
    %p106 = scmp.ne.s32.totalorder %s94, %s95
    %p107 = scmp.eq.s32.totalorder %s22, 1
    %p108 = por %p106, %p107
    %p110 = scmp.ne.s32.totalorder %s95, %s109
    %p111 = scmp.eq.s32.totalorder %s22, 0
    %p112 = por %p110, %p111
    %s114 = sadd.s32 %s113, 1
    %p117 = scmp.eq.s32.totalorder %s16, 1
    %p118 = scmp.ne.s32.totalorder %s113, %s115
    %p119 = scmp.eq.s32.totalorder %s16, 0
    %p120 = por %p118, %p119
    %p121 = scmp.ne.s32.totalorder %s113, %s115
    %p122 = scmp.eq.s32.totalorder %s21, 1
    %p123 = por %p121, %p122
    %p124 = scmp.ne.s32.totalorder %s115, %s116
    %p125 = scmp.eq.s32.totalorder %s21, 0
    %p126 = por %p124, %p125
    %p127 = scmp.ne.s32.totalorder %s115, %s116
    %p128 = scmp.eq.s32.totalorder %s22, 1
    %p129 = por %p127, %p128
    %p131 = scmp.ne.s32.totalorder %s116, %s130
    %p132 = scmp.eq.s32.totalorder %s22, 0
    %p133 = por %p131, %p132
    %s135 = sadd.s32 %s134, 1
    %p138 = scmp.eq.s32.totalorder %s16, 1
    %p139 = scmp.ne.s32.totalorder %s134, %s136
    %p140 = scmp.eq.s32.totalorder %s16, 0
    %p141 = por %p139, %p140
    %p142 = scmp.ne.s32.totalorder %s134, %s136
    %p143 = scmp.eq.s32.totalorder %s21, 1
    %p144 = por %p142, %p143
    %p145 = scmp.ne.s32.totalorder %s136, %s137
    %p146 = scmp.eq.s32.totalorder %s21, 0
    %p147 = por %p145, %p146
    %p148 = scmp.ne.s32.totalorder %s136, %s137
    %p149 = scmp.eq.s32.totalorder %s22, 1
    %p150 = por %p148, %p149
    %p152 = scmp.ne.s32.totalorder %s137, %s151
    %p153 = scmp.eq.s32.totalorder %s22, 0
    %p154 = por %p152, %p153
    %s156 = sadd.s32 %s155, 1
    %p159 = scmp.eq.s32.totalorder %s16, 1
    %p160 = scmp.ne.s32.totalorder %s155, %s157
    %p161 = scmp.eq.s32.totalorder %s16, 0
    %p162 = por %p160, %p161
    %p163 = scmp.ne.s32.totalorder %s155, %s157
    %p164 = scmp.eq.s32.totalorder %s21, 1
    %p165 = por %p163, %p164
    %p166 = scmp.ne.s32.totalorder %s157, %s158
    %p167 = scmp.eq.s32.totalorder %s21, 0
    %p168 = por %p166, %p167
    %p169 = scmp.ne.s32.totalorder %s157, %s158
    %p170 = scmp.eq.s32.totalorder %s22, 1
    %p171 = por %p169, %p170
    %p173 = scmp.ne.s32.totalorder %s158, %s172
    %p174 = scmp.eq.s32.totalorder %s22, 0
    %p175 = por %p173, %p174
    %s177 = sadd.s32 %s176, 1
    %p180 = scmp.eq.s32.totalorder %s16, 1
    %p181 = scmp.ne.s32.totalorder %s176, %s178
    %p182 = scmp.eq.s32.totalorder %s16, 0
    %p183 = por %p181, %p182
    %p184 = scmp.ne.s32.totalorder %s176, %s178
    %p185 = scmp.eq.s32.totalorder %s21, 1
    %p186 = por %p184, %p185
    %p187 = scmp.ne.s32.totalorder %s178, %s179
    %p188 = scmp.eq.s32.totalorder %s21, 0
    %p189 = por %p187, %p188
    %p190 = scmp.ne.s32.totalorder %s178, %s179
    %p191 = scmp.eq.s32.totalorder %s22, 1
    %p192 = por %p190, %p191
    %p194 = scmp.ne.s32.totalorder %s179, %s193
    %p195 = scmp.eq.s32.totalorder %s22, 0
    %p196 = por %p194, %p195
    %s197 = ssub.s32 %s16, %s23
    %p198 = scmp.eq.s32.totalorder %s197, 0
    %s200 = sadd.s32 %s199, 1
    %s201 = scalar_select %p198, %s199, %s200
    %p204 = pneg %p198
    %p205 = scmp.eq.s32.totalorder %s16, 1
    %p206 = por %p204, %p205
    %p207 = scmp.ne.s32.totalorder %s199, %s202
    %p208 = scmp.eq.s32.totalorder %s16, 0
    %p209 = por %p207, %p208
    %p210 = scmp.ne.s32.totalorder %s199, %s202
    %p211 = scmp.eq.s32.totalorder %s21, 1
    %p212 = por %p210, %p211
    %p213 = scmp.ne.s32.totalorder %s202, %s203
    %p214 = scmp.eq.s32.totalorder %s21, 0
    %p215 = por %p213, %p214
    %p216 = scmp.ne.s32.totalorder %s202, %s203
    %p217 = scmp.eq.s32.totalorder %s22, 1
    %p218 = por %p216, %p217
    %p220 = scmp.ne.s32.totalorder %s203, %s219
    %p221 = scmp.eq.s32.totalorder %s22, 0
    %p222 = por %p220, %p221
    %s223 = ssub.s32 %s16, %s23
    %p224 = scmp.eq.s32.totalorder %s223, 0
    %s226 = sadd.s32 %s225, 1
    %s227 = scalar_select %p224, %s225, %s226
    %p230 = pneg %p224
    %p231 = scmp.eq.s32.totalorder %s16, 1
    %p232 = por %p230, %p231
    %p233 = scmp.ne.s32.totalorder %s225, %s228
    %p234 = scmp.eq.s32.totalorder %s16, 0
    %p235 = por %p233, %p234
    %p236 = scmp.ne.s32.totalorder %s225, %s228
    %p237 = scmp.eq.s32.totalorder %s21, 1
    %p238 = por %p236, %p237
    %p239 = scmp.ne.s32.totalorder %s228, %s229
    %p240 = scmp.eq.s32.totalorder %s21, 0
    %p241 = por %p239, %p240
    %p242 = scmp.ne.s32.totalorder %s228, %s229
    %p243 = scmp.eq.s32.totalorder %s22, 1
    %p244 = por %p242, %p243
    %p246 = scmp.ne.s32.totalorder %s229, %s245
    %p247 = scmp.eq.s32.totalorder %s22, 0
    %p248 = por %p246, %p247
    %p249 = scmp.le.s32.totalorder 1, %s16
    %p250 = scmp.lt.s32.totalorder %s16, 3
    %p251 = pnand %p249, %p250
    %p252 = pneg %p251
    // Predicated region
    $region9: #{flow_pixel_cnn_forward.1} parent=5 // pred_check
      _
    $region10: #{flow_pixel_cnn_forward.1} parent=5 // pred_check_branch
      %254 = sbr.rel (%p251) target = $region12
    $region11: #{flow_pixel_cnn_forward.1} parent=5 // pred_region
      %s255 = ssub.s32 %s16, 1
      // Predicated region
      $region13: #{flow_pixel_cnn_forward.1} parent=11 // pred_check
        %p256 = pneg %p63
      $region14: #{flow_pixel_cnn_forward.1} parent=11 // pred_check_branch
        %258 = sbr.rel (%p256) target = $region16
      $region15: #{flow_pixel_cnn_forward.1} parent=11 // pred_region
        _
      $region16: #{flow_pixel_cnn_forward.1} parent=11 // pred_fallthru
        _
      // Predicated region
      $region17: #{flow_pixel_cnn_forward.1} parent=11 // pred_check
        %p259 = pneg %p84
      $region18: #{flow_pixel_cnn_forward.1} parent=11 // pred_check_branch
        %261 = sbr.rel (%p259) target = $region20
      $region19: #{flow_pixel_cnn_forward.1} parent=11 // pred_region
        _
      $region20: #{flow_pixel_cnn_forward.1} parent=11 // pred_fallthru
        _
      // Predicated region
      $region21: #{flow_pixel_cnn_forward.1} parent=11 // pred_check
        %p262 = pneg %p105
      $region22: #{flow_pixel_cnn_forward.1} parent=11 // pred_check_branch
        %264 = sbr.rel (%p262) target = $region24
      $region23: #{flow_pixel_cnn_forward.1} parent=11 // pred_region
        _
      $region24: #{flow_pixel_cnn_forward.1} parent=11 // pred_fallthru
        _
      // Predicated region
      $region25: #{flow_pixel_cnn_forward.1} parent=11 // pred_check
        %p265 = pneg %p126
      $region26: #{flow_pixel_cnn_forward.1} parent=11 // pred_check_branch
        %267 = sbr.rel (%p265) target = $region28
      $region27: #{flow_pixel_cnn_forward.1} parent=11 // pred_region
        _
      $region28: #{flow_pixel_cnn_forward.1} parent=11 // pred_fallthru
        _
      // Predicated region
      $region29: #{flow_pixel_cnn_forward.1} parent=11 // pred_check
        %p268 = pneg %p147
      $region30: #{flow_pixel_cnn_forward.1} parent=11 // pred_check_branch
        %270 = sbr.rel (%p268) target = $region32
      $region31: #{flow_pixel_cnn_forward.1} parent=11 // pred_region
        _
      $region32: #{flow_pixel_cnn_forward.1} parent=11 // pred_fallthru
        _
      // Predicated region
      $region33: #{flow_pixel_cnn_forward.1} parent=11 // pred_check
        %p271 = pneg %p168
      $region34: #{flow_pixel_cnn_forward.1} parent=11 // pred_check_branch
        %273 = sbr.rel (%p271) target = $region36
      $region35: #{flow_pixel_cnn_forward.1} parent=11 // pred_region
        _
      $region36: #{flow_pixel_cnn_forward.1} parent=11 // pred_fallthru
        _
      // Predicated region
      $region37: #{flow_pixel_cnn_forward.1} parent=11 // pred_check
        %p274 = pneg %p189
      $region38: #{flow_pixel_cnn_forward.1} parent=11 // pred_check_branch
        %276 = sbr.rel (%p274) target = $region40
      $region39: #{flow_pixel_cnn_forward.1} parent=11 // pred_region
        _
      $region40: #{flow_pixel_cnn_forward.1} parent=11 // pred_fallthru
        _
    $region12: #{flow_pixel_cnn_forward.1} parent=5 // pred_fallthru
      _
    %p277 = scmp.lt.s32.totalorder %s16, 2
    // Predicated region
    $region41: #{flow_pixel_cnn_forward.1} parent=5 // pred_check
      %p278 = pneg %p277
    $region42: #{flow_pixel_cnn_forward.1} parent=5 // pred_check_branch
      %280 = sbr.rel (%p278) target = $region44
    $region43: #{flow_pixel_cnn_forward.1} parent=5 // pred_region
      // Predicated region
      $region45: #{flow_pixel_cnn_forward.1} parent=43 // pred_check
        %p281 = pneg %p36
      $region46: #{flow_pixel_cnn_forward.1} parent=43 // pred_check_branch
        %283 = sbr.rel (%p281) target = $region48
      $region47: #{flow_pixel_cnn_forward.1} parent=43 // pred_region
        %p284 = scmp.lt.s32.totalorder %s16, 1
        %s285 = scalar_select %p284, %s16, 1
        %s286 = smul.addr %s285, 4
        %s287 = scalar_lea.vmem %s0, %s286
      $region48: #{flow_pixel_cnn_forward.1} parent=43 // pred_fallthru
        _
    $region44: #{flow_pixel_cnn_forward.1} parent=5 // pred_fallthru
      _
    %p288 = scmp.le.s32.totalorder 1, %s16
    %p289 = scmp.lt.s32.totalorder %s16, 3
    %p290 = pnand %p288, %p289
    %p291 = pneg %p290
    // Predicated region
    $region49: #{flow_pixel_cnn_forward.1} parent=5 // pred_check
      _
    $region50: #{flow_pixel_cnn_forward.1} parent=5 // pred_check_branch
      %293 = sbr.rel (%p290) target = $region52
    $region51: #{flow_pixel_cnn_forward.1} parent=5 // pred_region
      %s294 = ssub.s32 %s16, 1
      %p295 = scmp.lt.s32.totalorder %s21, 1
      %s296 = scalar_select %p295, %s21, 1
      %s297 = smul.addr %s296, 4
      %s298 = scalar_lea.vmem %s0, %s297
      %p299 = pneg %p42
      %p300 = pneg %p39
      %p301 = pneg %p63
      %p302 = pneg %p60
      %p303 = pneg %p84
      %p304 = pneg %p81
      %p305 = pneg %p105
      %p306 = pneg %p102
      %p307 = pneg %p126
      %p308 = pneg %p123
      %p309 = pneg %p147
      %p310 = pneg %p144
      %p311 = pneg %p168
      %p312 = pneg %p165
      %p313 = pneg %p189
      %p314 = pneg %p186
      %p315 = pneg %p215
      %p316 = pneg %p212
      %p317 = scmp.lt.s32.totalorder %s21, 1
      %s318 = scalar_select %p317, %s21, 1
      %s319 = smul.addr %s318, 3
      %s320 = scalar_lea.vmem %s8, %s319
      %p321 = pneg %p241
      %p322 = pneg %p238
      %p323 = scmp.lt.s32.totalorder %s21, 1
      %s324 = scalar_select %p323, %s21, 1
      %s325 = smul.addr %s324, 3
      %s326 = scalar_lea.vmem %s9, %s325
      %p327 = scmp.lt.s32.totalorder %s21, 1
      %s328 = scalar_select %p327, %s21, 1
      %s329 = smul.addr %s328, 4
      %s330 = scalar_lea.vmem %s0, %s329
      %p331 = scmp.lt.s32.totalorder %s21, 1
      %s332 = scalar_select %p331, %s21, 1
      %s333 = smul.addr %s332, 3
      %s334 = scalar_lea.vmem %s8, %s333
      %p335 = scmp.lt.s32.totalorder %s21, 1
      %s336 = scalar_select %p335, %s21, 1
      %s337 = smul.addr %s336, 3
      %s338 = scalar_lea.vmem %s9, %s337
      %v340 = vld [vmem:[%s330] sm:$0x7]
      %v341 = vlaneseq
      %vm342 = vcmp.ge.s32.totalorder %v341, 0
      %vm343 = vcmp.lt.s32.totalorder %v341, 352
      %vm344 = vmand %vm342, %vm343
      %345 = vst.msk [vmem:[#allocation3] ss:$8 sm:$0x7] %vm344, %v340
      %346 = vst.msk [vmem:[#allocation3] ss:$8 sm:$0x0] %vm344, %v340
      %v347 = vld [vmem:[%s330] sm:$0x7]
      %349 = vrot.lane.b32.xlu0 %v347, 127
      %v350 = vpop.permute.xlu0 %349
      %v351 = vrot.slane %v350, 1
      %vm352 = vcmask 1039360
      %v353 = vsel %vm352, %v350, %v351
      %s355 = scalar_lea.vmem [#allocation3], 1
      %356 = vst.msk [vmem:[%s355] ss:$8 sm:$0x7] %vm344, %v353
      %357 = vst.msk [vmem:[%s355] ss:$8 sm:$0x0] %vm344, %v353
      %v358 = vld [vmem:[%s330] sm:$0x7]
      %360 = vrot.lane.b32.xlu0 %v358, 126
      %v361 = vpop.permute.xlu0 %360
      %v362 = vrot.slane %v361, 1
      %vm363 = vcmask 1031168
      %v364 = vsel %vm363, %v361, %v362
      %s366 = scalar_lea.vmem [#allocation3], 2
      %367 = vst.msk [vmem:[%s366] ss:$8 sm:$0x7] %vm344, %v364
      %368 = vst.msk [vmem:[%s366] ss:$8 sm:$0x0] %vm344, %v364
      %v369 = vld [vmem:[%s330] sm:$0x7]
      %371 = vrot.lane.b32.xlu0 %v369, 125
      %v372 = vpop.permute.xlu0 %371
      %v373 = vrot.slane %v372, 1
      %vm374 = vcmask 1022976
      %v375 = vsel %vm374, %v372, %v373
      %s377 = scalar_lea.vmem [#allocation3], 3
      %378 = vst.msk [vmem:[%s377] ss:$8 sm:$0x7] %vm344, %v375
      %379 = vst.msk [vmem:[%s377] ss:$8 sm:$0x0] %vm344, %v375
      %v380 = vld [vmem:[%s330] sm:$0x7]
      %382 = vrot.lane.b32.xlu0 %v380, 124
      %v383 = vpop.permute.xlu0 %382
      %v384 = vrot.slane %v383, 1
      %vm385 = vcmask 1014784
      %v386 = vsel %vm385, %v383, %v384
      %s388 = scalar_lea.vmem [#allocation3], 4
      %389 = vst.msk [vmem:[%s388] ss:$8 sm:$0x7] %vm344, %v386
      %390 = vst.msk [vmem:[%s388] ss:$8 sm:$0x0] %vm344, %v386
      %v391 = vld [vmem:[%s330] sm:$0x7]
      %393 = vrot.lane.b32.xlu0 %v391, 123
      %v394 = vpop.permute.xlu0 %393
      %v395 = vrot.slane %v394, 1
      %vm396 = vcmask 1006592
      %v397 = vsel %vm396, %v394, %v395
      %s399 = scalar_lea.vmem [#allocation3], 5
      %400 = vst.msk [vmem:[%s399] ss:$8 sm:$0x7] %vm344, %v397
      %401 = vst.msk [vmem:[%s399] ss:$8 sm:$0x0] %vm344, %v397
      %v402 = vld [vmem:[%s330] sm:$0x7]
      %404 = vrot.lane.b32.xlu0 %v402, 122
      %v405 = vpop.permute.xlu0 %404
      %v406 = vrot.slane %v405, 1
      %vm407 = vcmask 998400
      %v408 = vsel %vm407, %v405, %v406
      %s410 = scalar_lea.vmem [#allocation3], 6
      %411 = vst.msk [vmem:[%s410] ss:$8 sm:$0x7] %vm344, %v408
      %412 = vst.msk [vmem:[%s410] ss:$8 sm:$0x0] %vm344, %v408
      %v413 = vld [vmem:[%s330] sm:$0x7]
      %415 = vrot.lane.b32.xlu0 %v413, 106
      %v416 = vpop.permute.xlu0 %415
      %v417 = vrot.slane %v416, 1
      %vm418 = vcmask 867328
      %v419 = vsel %vm418, %v416, %v417
      %s421 = scalar_lea.vmem [#allocation3], 7
      %422 = vst.msk [vmem:[%s421] ss:$8 sm:$0x7] %vm344, %v419
      %423 = vst.msk [vmem:[%s421] ss:$8 sm:$0x0] %vm344, %v419
      %v424 = vld [vmem:[%s330] sm:$0x7]
      %426 = vrot.lane.b32.xlu0 %v424, 105
      %v427 = vpop.permute.xlu0 %426
      %v428 = vrot.slane %v427, 1
      %vm429 = vcmask 859136
      %v430 = vsel %vm429, %v427, %v428
      %s432 = scalar_lea.vmem [#allocation3], 24
      %433 = vst.msk [vmem:[%s432] ss:$8 sm:$0x7] %vm344, %v430
      %434 = vst.msk [vmem:[%s432] ss:$8 sm:$0x0] %vm344, %v430
      %v435 = vld [vmem:[%s330] sm:$0x7]
      %437 = vrot.lane.b32.xlu0 %v435, 104
      %v438 = vpop.permute.xlu0 %437
      %v439 = vrot.slane %v438, 1
      %vm440 = vcmask 850944
      %v441 = vsel %vm440, %v438, %v439
      %s443 = scalar_lea.vmem [#allocation3], 25
      %444 = vst.msk [vmem:[%s443] ss:$8 sm:$0x7] %vm344, %v441
      %445 = vst.msk [vmem:[%s443] ss:$8 sm:$0x0] %vm344, %v441
      %v446 = vld [vmem:[%s330] sm:$0x7]
      %448 = vrot.lane.b32.xlu0 %v446, 103
      %v449 = vpop.permute.xlu0 %448
      %v450 = vrot.slane %v449, 1
      %vm451 = vcmask 842752
      %v452 = vsel %vm451, %v449, %v450
      %s454 = scalar_lea.vmem [#allocation3], 26
      %455 = vst.msk [vmem:[%s454] ss:$8 sm:$0x7] %vm344, %v452
      %456 = vst.msk [vmem:[%s454] ss:$8 sm:$0x0] %vm344, %v452
      %v457 = vld [vmem:[%s330] sm:$0x7]
      %459 = vrot.lane.b32.xlu0 %v457, 102
      %v460 = vpop.permute.xlu0 %459
      %v461 = vrot.slane %v460, 1
      %vm462 = vcmask 834560
      %v463 = vsel %vm462, %v460, %v461
      %s465 = scalar_lea.vmem [#allocation3], 27
      %466 = vst.msk [vmem:[%s465] ss:$8 sm:$0x7] %vm344, %v463
      %467 = vst.msk [vmem:[%s465] ss:$8 sm:$0x0] %vm344, %v463
      %v468 = vld [vmem:[%s330] sm:$0x7]
      %470 = vrot.lane.b32.xlu0 %v468, 101
      %v471 = vpop.permute.xlu0 %470
      %v472 = vrot.slane %v471, 1
      %vm473 = vcmask 826368
      %v474 = vsel %vm473, %v471, %v472
      %s476 = scalar_lea.vmem [#allocation3], 28
      %477 = vst.msk [vmem:[%s476] ss:$8 sm:$0x7] %vm344, %v474
      %478 = vst.msk [vmem:[%s476] ss:$8 sm:$0x0] %vm344, %v474
      %v479 = vld [vmem:[%s330] sm:$0x7]
      %481 = vrot.lane.b32.xlu0 %v479, 100
      %v482 = vpop.permute.xlu0 %481
      %v483 = vrot.slane %v482, 1
      %vm484 = vcmask 818176
      %v485 = vsel %vm484, %v482, %v483
      %s487 = scalar_lea.vmem [#allocation3], 29
      %488 = vst.msk [vmem:[%s487] ss:$8 sm:$0x7] %vm344, %v485
      %489 = vst.msk [vmem:[%s487] ss:$8 sm:$0x0] %vm344, %v485
      %v490 = vld [vmem:[%s330] sm:$0xf]
      %492 = vrot.lane.b32.xlu0 %v490, 84
      %v493 = vpop.permute.xlu0 %492
      %v494 = vrot.slane %v493, 1
      %vm495 = vcmask 687104
      %v496 = vsel %vm495, %v493, %v494
      %s498 = scalar_lea.vmem [#allocation3], 30
      %499 = vst.msk [vmem:[%s498] ss:$8 sm:$0x7] %vm344, %v496
      %500 = vst.msk [vmem:[%s498] ss:$8 sm:$0x0] %vm344, %v496
      %v501 = vld [vmem:[%s330] sm:$0xf]
      %503 = vrot.lane.b32.xlu0 %v501, 83
      %v504 = vpop.permute.xlu0 %503
      %v505 = vrot.slane %v504, 1
      %vm506 = vcmask 678912
      %v507 = vsel %vm506, %v504, %v505
      %s509 = scalar_lea.vmem [#allocation3], 31
      %510 = vst.msk [vmem:[%s509] ss:$8 sm:$0x7] %vm344, %v507
      %511 = vst.msk [vmem:[%s509] ss:$8 sm:$0x0] %vm344, %v507
      %v512 = vld [vmem:[%s330] sm:$0xf]
      %514 = vrot.lane.b32.xlu0 %v512, 82
      %v515 = vpop.permute.xlu0 %514
      %v516 = vrot.slane %v515, 1
      %vm517 = vcmask 670720
      %v518 = vsel %vm517, %v515, %v516
      %s520 = scalar_lea.vmem [#allocation3], 48
      %521 = vst.msk [vmem:[%s520] ss:$8 sm:$0x7] %vm344, %v518
      %522 = vst.msk [vmem:[%s520] ss:$8 sm:$0x0] %vm344, %v518
      %v523 = vld [vmem:[%s330] sm:$0xf]
      %525 = vrot.lane.b32.xlu0 %v523, 81
      %v526 = vpop.permute.xlu0 %525
      %v527 = vrot.slane %v526, 1
      %vm528 = vcmask 662528
      %v529 = vsel %vm528, %v526, %v527
      %s531 = scalar_lea.vmem [#allocation3], 49
      %532 = vst.msk [vmem:[%s531] ss:$8 sm:$0x7] %vm344, %v529
      %533 = vst.msk [vmem:[%s531] ss:$8 sm:$0x0] %vm344, %v529
      %v534 = vld [vmem:[%s330] sm:$0xf]
      %536 = vrot.lane.b32.xlu0 %v534, 80
      %v537 = vpop.permute.xlu0 %536
      %v538 = vrot.slane %v537, 1
      %vm539 = vcmask 654336
      %v540 = vsel %vm539, %v537, %v538
      %s542 = scalar_lea.vmem [#allocation3], 50
      %543 = vst.msk [vmem:[%s542] ss:$8 sm:$0x7] %vm344, %v540
      %544 = vst.msk [vmem:[%s542] ss:$8 sm:$0x0] %vm344, %v540
      %v545 = vld [vmem:[%s330] sm:$0xf]
      %547 = vrot.lane.b32.xlu0 %v545, 79
      %v548 = vpop.permute.xlu0 %547
      %v549 = vrot.slane %v548, 1
      %vm550 = vcmask 646144
      %v551 = vsel %vm550, %v548, %v549
      %s553 = scalar_lea.vmem [#allocation3], 51
      %554 = vst.msk [vmem:[%s553] ss:$8 sm:$0x7] %vm344, %v551
      %555 = vst.msk [vmem:[%s553] ss:$8 sm:$0x0] %vm344, %v551
      %v556 = vld [vmem:[%s330] sm:$0xf]
      %558 = vrot.lane.b32.xlu0 %v556, 78
      %v559 = vpop.permute.xlu0 %558
      %v560 = vrot.slane %v559, 1
      %vm561 = vcmask 637952
      %v562 = vsel %vm561, %v559, %v560
      %s564 = scalar_lea.vmem [#allocation3], 52
      %565 = vst.msk [vmem:[%s564] ss:$8 sm:$0x7] %vm344, %v562
      %566 = vst.msk [vmem:[%s564] ss:$8 sm:$0x0] %vm344, %v562
      %v567 = vld [vmem:[%s330] sm:$0xf]
      %569 = vrot.lane.b32.xlu0 %v567, 62
      %v570 = vpop.permute.xlu0 %569
      %v571 = vrot.slane %v570, 1
      %vm572 = vcmask 506880
      %v573 = vsel %vm572, %v570, %v571
      %s575 = scalar_lea.vmem [#allocation3], 53
      %576 = vst.msk [vmem:[%s575] ss:$8 sm:$0x7] %vm344, %v573
      %577 = vst.msk [vmem:[%s575] ss:$8 sm:$0x0] %vm344, %v573
      %v578 = vld [vmem:[%s330] sm:$0xf]
      %580 = vrot.lane.b32.xlu0 %v578, 61
      %v581 = vpop.permute.xlu0 %580
      %v582 = vrot.slane %v581, 1
      %vm583 = vcmask 498688
      %v584 = vsel %vm583, %v581, %v582
      %s586 = scalar_lea.vmem [#allocation3], 54
      %587 = vst.msk [vmem:[%s586] ss:$8 sm:$0x7] %vm344, %v584
      %588 = vst.msk [vmem:[%s586] ss:$8 sm:$0x0] %vm344, %v584
      %v589 = vld [vmem:[%s330] sm:$0xf]
      %591 = vrot.lane.b32.xlu0 %v589, 60
      %v592 = vpop.permute.xlu0 %591
      %v593 = vrot.slane %v592, 1
      %vm594 = vcmask 490496
      %v595 = vsel %vm594, %v592, %v593
      %s597 = scalar_lea.vmem [#allocation3], 55
      %598 = vst.msk [vmem:[%s597] ss:$8 sm:$0x7] %vm344, %v595
      %599 = vst.msk [vmem:[%s597] ss:$8 sm:$0x0] %vm344, %v595
      %600 = vst [vmem:[#allocation3 + $0x48] sm:$0xff] 0.0
      %601 = vst [vmem:[#allocation3 + $0x50] sm:$0xff] 0.0
      %vm602 = vcmask 785408
      %603 = vst.msk [vmem:[#allocation3 + $0x58] sm:$0xff] %vm602, 0.0
      %v604 = vld [vmem:[%s2] sm:$0xf]
      %v605 = vld [vmem:[%s2 + $0x4] sm:$0xf]
      %v606 = vld [vmem:[%s2 + $0x8] sm:$0xf]
      %v607 = vld [vmem:[%s2 + $0xc] sm:$0xf]
      %v608 = vld [vmem:[#allocation3] sm:$0xff]
      %v609 = vld [vmem:[#allocation3 + $0x8] sm:$0xff]
      %v610 = vld [vmem:[#allocation3 + $0x10] sm:$0xff]
      %v611 = vld [vmem:[#allocation3 + $0x18] sm:$0xff]
      %v612 = vld [vmem:[#allocation3 + $0x20] sm:$0xff]
      %v613 = vld [vmem:[#allocation3 + $0x28] sm:$0xff]
      %v614 = vld [vmem:[#allocation3 + $0x30] sm:$0xff]
      %v615 = vld [vmem:[#allocation3 + $0x38] sm:$0xff]
      %v616 = vld [vmem:[#allocation3 + $0x40] sm:$0xff]
      %v617 = vld [vmem:[#allocation3 + $0x48] sm:$0xff]
      %v618 = vld [vmem:[#allocation3 + $0x50] sm:$0xff]
      %v619 = vld [vmem:[#allocation3 + $0x58] sm:$0xff]
      %v620 = vpack.c.bf16 %v611, %v608
      %v621 = vpack.c.bf16 %v612, %v609
      %v622 = vpack.c.bf16 %v613, %v610
      %v623 = vpack.c.bf16 %v617, %v614
      %v624 = vpack.c.bf16 %v618, %v615
      %v625 = vpack.c.bf16 %v619, %v616
      %v626 = vld [vmem:[%s3] sm:$0xff]
      %v627 = vld [vmem:[%s3 + $0x8] sm:$0xff]
      %v628 = vld [vmem:[%s3 + $0x10] sm:$0xff]
      %v629 = vld [vmem:[%s3 + $0x18] sm:$0xff]
      %631 = vset.pattern.permute.xlu0 0
      %632 = vperm.xlu0 %631, %v626
      %v633 = vpop.permute.xlu0 %632
      %636 = vset.pattern.permute.xlu0 0
      %637 = vperm.xlu0 %636, %v627
      %v638 = vpop.permute.xlu0 %637
      %641 = vset.pattern.permute.xlu0 0
      %642 = vperm.xlu0 %641, %v628
      %v643 = vpop.permute.xlu0 %642
      %646 = vset.pattern.permute.xlu0 0
      %647 = vperm.xlu0 %646, %v629
      %v648 = vpop.permute.xlu0 %647
      %v654 = vunpack.c.l.b16 %v604
      %v655 = vunpack.c.l.b16 %v605
      %v656 = vunpack.c.l.b16 %v606
      %v657 = vunpack.c.l.b16 %v607
      %v658 = vpack.c.b16 %v655, %v654
      %v659 = vpack.c.b16 %v657, %v656
      %vm660 = vcmask 261120
      %v662 = vsel %vm660, %v658, 0
      %v665 = vsel %vm660, %v659, 0
      %667 = vmatprep.subr.bf16.mxu0 %v621
      %668 = vmatpush1.bf16.msra.mxu0 %v620
      %669 = vmatprep.subr.bf16.mxu0 %v624
      %670 = vmatpush1.bf16.msra.mxu0 %v623
      %671 = vmatprep.subr.bf16.mxu0 0
      %672 = vmatpush1.bf16.msra.mxu0 0
      %673 = vmatprep.subr.bf16.mxu0 0
      %674 = vmatpush1.bf16.msra.mxu0 0
      %675 = vmatprep.subr.bf16.mxu0 0
      %676 = vmatpush1.bf16.msra.mxu0 0
      %677 = vmatprep.subr.bf16.mxu0 0
      %678 = vmatpush1.bf16.msra.mxu0 0
      %679 = vmatprep.subr.bf16.mxu0 0
      %680 = vmatpush1.bf16.msra.mxu0 0
      %681 = vmatprep.subr.bf16.mxu0 0
      %682 = vmatpush1.bf16.msra.mxu0 0
      %683 = vmatprep.subr.bf16.mxu0 0
      %684 = vmatpush1.bf16.msra.mxu0 0
      %685 = vmatprep.subr.bf16.mxu0 0
      %686 = vmatpush1.bf16.msra.mxu0 0
      %687 = vmatprep.subr.bf16.mxu0 0
      %688 = vmatpush1.bf16.msra.mxu0 0
      %689 = vmatprep.subr.bf16.mxu0 0
      %690 = vmatpush1.bf16.msra.mxu0 0
      %691 = vmatprep.subr.bf16.mxu0 0
      %692 = vmatpush1.bf16.msra.mxu0 0
      %693 = vmatprep.subr.bf16.mxu0 0
      %694 = vmatpush1.bf16.msra.mxu0 0
      %695 = vmatprep.subr.bf16.mxu0 0
      %696 = vmatpush1.bf16.msra.mxu0 0
      %697 = vmatprep.subr.bf16.mxu0 0
      %698 = vmatpush1.bf16.msra.mxu0 0
      %699 = vmatprep.mubr.bf16.mxu0 0
      %700 = vmatmul.mubr.bf16.gmra.mrb[0].mxu0 %v662
      %v701 = vpop.f32.mrb[0].mxu0
      %v702 = vadd.f32 %v633, %v701
      %v703 = vpop.f32.mrb[0].mxu0
      %v704 = vadd.f32 %v633, %v703
      %v705 = vpop.f32.mrb[0].mxu0
      %v706 = vadd.f32 %v638, %v705
      %v707 = vpop.f32.mrb[0].mxu0
      %v708 = vadd.f32 %v638, %v707
      %709 = vmatprep.mubr.bf16.mxu0 0
      %710 = vmatmul.mubr.bf16.gmra.mrb[0].mxu0 %v665
      %v711 = vpop.f32.mrb[0].mxu0
      %v712 = vadd.f32 %v643, %v711
      %v713 = vpop.f32.mrb[0].mxu0
      %v714 = vadd.f32 %v643, %v713
      %v715 = vpop.f32.mrb[0].mxu0
      %v716 = vadd.f32 %v648, %v715
      %v717 = vpop.f32.mrb[0].mxu0
      %v718 = vadd.f32 %v648, %v717
      %719 = vdwg.mxu0
      %720 = vmatprep.subr.bf16.mxu0 0
      %721 = vmatpush1.bf16.msra.mxu0 %v622
      %722 = vmatprep.subr.bf16.mxu0 0
      %723 = vmatpush1.bf16.msra.mxu0 %v625
      %724 = vmatprep.subr.bf16.mxu0 0
      %725 = vmatpush1.bf16.msra.mxu0 0
      %726 = vmatprep.subr.bf16.mxu0 0
      %727 = vmatpush1.bf16.msra.mxu0 0
      %728 = vmatprep.subr.bf16.mxu0 0
      %729 = vmatpush1.bf16.msra.mxu0 0
      %730 = vmatprep.subr.bf16.mxu0 0
      %731 = vmatpush1.bf16.msra.mxu0 0
      %732 = vmatprep.subr.bf16.mxu0 0
      %733 = vmatpush1.bf16.msra.mxu0 0
      %734 = vmatprep.subr.bf16.mxu0 0
      %735 = vmatpush1.bf16.msra.mxu0 0
      %736 = vmatprep.subr.bf16.mxu0 0
      %737 = vmatpush1.bf16.msra.mxu0 0
      %738 = vmatprep.subr.bf16.mxu0 0
      %739 = vmatpush1.bf16.msra.mxu0 0
      %740 = vmatprep.subr.bf16.mxu0 0
      %741 = vmatpush1.bf16.msra.mxu0 0
      %742 = vmatprep.subr.bf16.mxu0 0
      %743 = vmatpush1.bf16.msra.mxu0 0
      %744 = vmatprep.subr.bf16.mxu0 0
      %745 = vmatpush1.bf16.msra.mxu0 0
      %746 = vmatprep.subr.bf16.mxu0 0
      %747 = vmatpush1.bf16.msra.mxu0 0
      %748 = vmatprep.subr.bf16.mxu0 0
      %749 = vmatpush1.bf16.msra.mxu0 0
      %750 = vmatprep.subr.bf16.mxu0 0
      %751 = vmatpush1.bf16.msra.mxu0 0
      %752 = vmatprep.mubr.bf16.mxu0 0
      %753 = vmatmul.mubr.bf16.gmra.mrb[0].mxu0 %v662
      %v754 = vpop.f32.mrb[0].mxu0
      %v755 = vadd.f32 %v633, %v754
      %v756 = vpop.f32.mrb[0].mxu0
      %v757 = vpop.f32.mrb[0].mxu0
      %v758 = vadd.f32 %v638, %v757
      %v759 = vpop.f32.mrb[0].mxu0
      %760 = vmatprep.mubr.bf16.mxu0 0
      %761 = vmatmul.mubr.bf16.gmra.mrb[0].mxu0 %v665
      %v762 = vpop.f32.mrb[0].mxu0
      %v763 = vadd.f32 %v643, %v762
      %v764 = vpop.f32.mrb[0].mxu0
      %v765 = vpop.f32.mrb[0].mxu0
      %v766 = vadd.f32 %v648, %v765
      %v767 = vpop.f32.mrb[0].mxu0
      %768 = vdwg.mxu0
      %v769 = vmax.f32 %v702, 0.0
      %v770 = vmax.f32 %v704, 0.0
      %v771 = vmax.f32 %v755, 0.0
      %v772 = vmax.f32 %v706, 0.0
      %v773 = vmax.f32 %v708, 0.0
      %v774 = vmax.f32 %v758, 0.0
      %v775 = vmax.f32 %v712, 0.0
      %v776 = vmax.f32 %v714, 0.0
      %v777 = vmax.f32 %v763, 0.0
      %v778 = vmax.f32 %v716, 0.0
      %v779 = vmax.f32 %v718, 0.0
      %v780 = vmax.f32 %v766, 0.0
      %v781 = vld [vmem:[%s1] sm:$0x7]
      %v783 = vlaneseq
      %v784 = vshrl.u32 %v783, 7
      %v785 = vsub.s32 0, %v784
      %v786 = vrot.slane %v781, %v785
      %v787 = vlaneseq
      %v788 = vshrl.u32 %v787, 7
      %v789 = vsub.s32 1, %v788
      %v790 = vrot.slane %v781, %v789
      %v791 = vlaneseq
      %v792 = vshrl.u32 %v791, 7
      %v793 = vsub.s32 2, %v792
      %v794 = vrot.slane %v781, %v793
      %v798 = vmul.f32 %v769, %v786
      %v799 = vmul.f32 %v770, %v790
      %v800 = vmul.f32 %v771, %v794
      %v801 = vmul.f32 %v772, %v786
      %v802 = vmul.f32 %v773, %v790
      %v803 = vmul.f32 %v774, %v794
      %v804 = vmul.f32 %v775, %v786
      %v805 = vmul.f32 %v776, %v790
      %v806 = vmul.f32 %v777, %v794
      %v807 = vmul.f32 %v778, %v786
      %v808 = vmul.f32 %v779, %v790
      %v809 = vmul.f32 %v780, %v794
      %vm810 = vcmask 564224
      %811 = vst.msk [vmem:[#allocation2] sm:$0xff] %vm810, 0
      %812 = vst.msk [vmem:[#allocation2 + $0x20] sm:$0xff] %vm810, 0
      %v813 = vpack.c.bf16 %v801, %v798
      %v814 = vpack.c.bf16 %v802, %v799
      %v815 = vpack.c.bf16 %v803, %v800
      %v816 = vpack.c.bf16 %v807, %v804
      %v817 = vpack.c.bf16 %v808, %v805
      %v818 = vpack.c.bf16 %v809, %v806
      %825 = vrot.lane.b32.xlu0 %v813, 69
      %v826 = vpop.permute.xlu0 %825
      %827 = vrot.lane.b32.xlu0 %v814, 69
      %v828 = vpop.permute.xlu0 %827
      %829 = vrot.lane.b32.xlu0 %v815, 69
      %v830 = vpop.permute.xlu0 %829
      %831 = vrot.lane.b32.xlu0 %v816, 69
      %v832 = vpop.permute.xlu0 %831
      %833 = vrot.lane.b32.xlu0 %v817, 69
      %v834 = vpop.permute.xlu0 %833
      %835 = vrot.lane.b32.xlu0 %v818, 69
      %v836 = vpop.permute.xlu0 %835
      %vm837 = vcmask 564224
      %v838 = vsel %vm837, %v826, %v828
      %v839 = vsel %vm837, %v828, %v830
      %v840 = vsel %vm837, %v832, %v834
      %v841 = vsel %vm837, %v834, %v836
      %vm850 = vcmask 1048104
      %851 = vst.msk [vmem:[#allocation2] sm:$0xff] %vm850, %v826
      %852 = vst [vmem:[#allocation2 + $0x8] sm:$0xff] %v838
      %853 = vst [vmem:[#allocation2 + $0x10] sm:$0xff] %v839
      %vm854 = vcmask 302080
      %855 = vst.msk [vmem:[#allocation2 + $0x18] sm:$0xff] %vm854, %v830
      %856 = vst.msk [vmem:[#allocation2 + $0x20] sm:$0xff] %vm850, %v832
      %857 = vst [vmem:[#allocation2 + $0x28] sm:$0xff] %v840
      %858 = vst [vmem:[#allocation2 + $0x30] sm:$0xff] %v841
      %859 = vst.msk [vmem:[#allocation2 + $0x38] sm:$0xff] %vm854, %v836
      %v860 = vld [vmem:[#allocation2] sm:$0xff]
      %v861 = vld [vmem:[#allocation2 + $0x8] sm:$0xff]
      %v862 = vld [vmem:[#allocation2 + $0x10] sm:$0xff]
      %v863 = vld [vmem:[#allocation2 + $0x18] sm:$0xff]
      %v864 = vld [vmem:[#allocation2 + $0x20] sm:$0xff]
      %v865 = vld [vmem:[#allocation2 + $0x28] sm:$0xff]
      %v866 = vld [vmem:[#allocation2 + $0x30] sm:$0xff]
      %v867 = vld [vmem:[#allocation2 + $0x38] sm:$0xff]
      %876 = vrot.lane.b32.xlu0 %v860, 82
      %v877 = vpop.permute.xlu0 %876
      %878 = vrot.lane.b32.xlu0 %v861, 82
      %v879 = vpop.permute.xlu0 %878
      %880 = vrot.lane.b32.xlu0 %v862, 82
      %v881 = vpop.permute.xlu0 %880
      %882 = vrot.lane.b32.xlu0 %v863, 82
      %v883 = vpop.permute.xlu0 %882
      %884 = vrot.lane.b32.xlu0 %v864, 82
      %v885 = vpop.permute.xlu0 %884
      %886 = vrot.lane.b32.xlu0 %v865, 82
      %v887 = vpop.permute.xlu0 %886
      %888 = vrot.lane.b32.xlu0 %v866, 82
      %v889 = vpop.permute.xlu0 %888
      %890 = vrot.lane.b32.xlu0 %v867, 82
      %v891 = vpop.permute.xlu0 %890
      %vm892 = vcmask 670720
      %v893 = vsel %vm892, %v877, %v879
      %v894 = vsel %vm892, %v879, %v881
      %v895 = vsel %vm892, %v881, %v883
      %v896 = vsel %vm892, %v885, %v887
      %v897 = vsel %vm892, %v887, %v889
      %v898 = vsel %vm892, %v889, %v891
      %905 = vst [vmem:[#allocation4] sm:$0xff] %v893
      %906 = vst [vmem:[#allocation4 + $0x8] sm:$0xff] %v894
      %907 = vst.msk [vmem:[#allocation4 + $0x10] sm:$0xff] %vm602, %v895
      %908 = vst [vmem:[#allocation4 + $0x18] sm:$0xff] %v896
      %909 = vst [vmem:[#allocation4 + $0x20] sm:$0xff] %v897
      %910 = vst.msk [vmem:[#allocation4 + $0x28] sm:$0xff] %vm602, %v898
      %v911 = vld [vmem:[#allocation2] sm:$0xff]
      %v912 = vld [vmem:[#allocation2 + $0x8] sm:$0xff]
      %v913 = vld [vmem:[#allocation2 + $0x10] sm:$0xff]
      %v914 = vld [vmem:[#allocation2 + $0x18] sm:$0xff]
      %v915 = vld [vmem:[#allocation2 + $0x20] sm:$0xff]
      %v916 = vld [vmem:[#allocation2 + $0x28] sm:$0xff]
      %v917 = vld [vmem:[#allocation2 + $0x30] sm:$0xff]
      %v918 = vld [vmem:[#allocation2 + $0x38] sm:$0xff]
      %927 = vrot.lane.b32.xlu0 %v911, 81
      %v928 = vpop.permute.xlu0 %927
      %929 = vrot.lane.b32.xlu0 %v912, 81
      %v930 = vpop.permute.xlu0 %929
      %931 = vrot.lane.b32.xlu0 %v913, 81
      %v932 = vpop.permute.xlu0 %931
      %933 = vrot.lane.b32.xlu0 %v914, 81
      %v934 = vpop.permute.xlu0 %933
      %935 = vrot.lane.b32.xlu0 %v915, 81
      %v936 = vpop.permute.xlu0 %935
      %937 = vrot.lane.b32.xlu0 %v916, 81
      %v938 = vpop.permute.xlu0 %937
      %939 = vrot.lane.b32.xlu0 %v917, 81
      %v940 = vpop.permute.xlu0 %939
      %941 = vrot.lane.b32.xlu0 %v918, 81
      %v942 = vpop.permute.xlu0 %941
      %vm943 = vcmask 662528
      %v944 = vsel %vm943, %v928, %v930
      %v945 = vsel %vm943, %v930, %v932
      %v946 = vsel %vm943, %v932, %v934
      %v947 = vsel %vm943, %v936, %v938
      %v948 = vsel %vm943, %v938, %v940
      %v949 = vsel %vm943, %v940, %v942
      %956 = vst [vmem:[#allocation4 + $0x30] sm:$0xff] %v944
      %957 = vst [vmem:[#allocation4 + $0x38] sm:$0xff] %v945
      %958 = vst.msk [vmem:[#allocation4 + $0x40] sm:$0xff] %vm602, %v946
      %959 = vst [vmem:[#allocation4 + $0x48] sm:$0xff] %v947
      %960 = vst [vmem:[#allocation4 + $0x50] sm:$0xff] %v948
      %961 = vst.msk [vmem:[#allocation4 + $0x58] sm:$0xff] %vm602, %v949
      %v962 = vld [vmem:[#allocation2] sm:$0xff]
      %v963 = vld [vmem:[#allocation2 + $0x8] sm:$0xff]
      %v964 = vld [vmem:[#allocation2 + $0x10] sm:$0xff]
      %v965 = vld [vmem:[#allocation2 + $0x18] sm:$0xff]
      %v966 = vld [vmem:[#allocation2 + $0x20] sm:$0xff]
      %v967 = vld [vmem:[#allocation2 + $0x28] sm:$0xff]
      %v968 = vld [vmem:[#allocation2 + $0x30] sm:$0xff]
      %v969 = vld [vmem:[#allocation2 + $0x38] sm:$0xff]
      %978 = vrot.lane.b32.xlu0 %v962, 80
      %v979 = vpop.permute.xlu0 %978
      %980 = vrot.lane.b32.xlu0 %v963, 80
      %v981 = vpop.permute.xlu0 %980
      %982 = vrot.lane.b32.xlu0 %v964, 80
      %v983 = vpop.permute.xlu0 %982
      %984 = vrot.lane.b32.xlu0 %v965, 80
      %v985 = vpop.permute.xlu0 %984
      %986 = vrot.lane.b32.xlu0 %v966, 80
      %v987 = vpop.permute.xlu0 %986
      %988 = vrot.lane.b32.xlu0 %v967, 80
      %v989 = vpop.permute.xlu0 %988
      %990 = vrot.lane.b32.xlu0 %v968, 80
      %v991 = vpop.permute.xlu0 %990
      %992 = vrot.lane.b32.xlu0 %v969, 80
      %v993 = vpop.permute.xlu0 %992
      %vm994 = vcmask 654336
      %v995 = vsel %vm994, %v979, %v981
      %v996 = vsel %vm994, %v981, %v983
      %v997 = vsel %vm994, %v983, %v985
      %v998 = vsel %vm994, %v987, %v989
      %v999 = vsel %vm994, %v989, %v991
      %v1000 = vsel %vm994, %v991, %v993
      %1007 = vst [vmem:[#allocation4 + $0x60] sm:$0xff] %v995
      %1008 = vst [vmem:[#allocation4 + $0x68] sm:$0xff] %v996
      %1009 = vst.msk [vmem:[#allocation4 + $0x70] sm:$0xff] %vm602, %v997
      %1010 = vst [vmem:[#allocation4 + $0x78] sm:$0xff] %v998
      %1011 = vst [vmem:[#allocation4 + $0x80] sm:$0xff] %v999
      %1012 = vst.msk [vmem:[#allocation4 + $0x88] sm:$0xff] %vm602, %v1000
      %v1013 = vld [vmem:[#allocation2] sm:$0xff]
      %v1014 = vld [vmem:[#allocation2 + $0x8] sm:$0xff]
      %v1015 = vld [vmem:[#allocation2 + $0x10] sm:$0xff]
      %v1016 = vld [vmem:[#allocation2 + $0x18] sm:$0xff]
      %v1017 = vld [vmem:[#allocation2 + $0x20] sm:$0xff]
      %v1018 = vld [vmem:[#allocation2 + $0x28] sm:$0xff]
      %v1019 = vld [vmem:[#allocation2 + $0x30] sm:$0xff]
      %v1020 = vld [vmem:[#allocation2 + $0x38] sm:$0xff]
      %1029 = vrot.lane.b32.xlu0 %v1013, 60
      %v1030 = vpop.permute.xlu0 %1029
      %1031 = vrot.lane.b32.xlu0 %v1014, 60
      %v1032 = vpop.permute.xlu0 %1031
      %1033 = vrot.lane.b32.xlu0 %v1015, 60
      %v1034 = vpop.permute.xlu0 %1033
      %1035 = vrot.lane.b32.xlu0 %v1016, 60
      %v1036 = vpop.permute.xlu0 %1035
      %1037 = vrot.lane.b32.xlu0 %v1017, 60
      %v1038 = vpop.permute.xlu0 %1037
      %1039 = vrot.lane.b32.xlu0 %v1018, 60
      %v1040 = vpop.permute.xlu0 %1039
      %1041 = vrot.lane.b32.xlu0 %v1019, 60
      %v1042 = vpop.permute.xlu0 %1041
      %1043 = vrot.lane.b32.xlu0 %v1020, 60
      %v1044 = vpop.permute.xlu0 %1043
      %vm1045 = vcmask 490496
      %v1046 = vsel %vm1045, %v1030, %v1032
      %v1047 = vsel %vm1045, %v1032, %v1034
      %v1048 = vsel %vm1045, %v1034, %v1036
      %v1049 = vsel %vm1045, %v1038, %v1040
      %v1050 = vsel %vm1045, %v1040, %v1042
      %v1051 = vsel %vm1045, %v1042, %v1044
      %1058 = vst [vmem:[#allocation4 + $0x90] sm:$0xff] %v1046
      %1059 = vst [vmem:[#allocation4 + $0x98] sm:$0xff] %v1047
      %1060 = vst.msk [vmem:[#allocation4 + $0xa0] sm:$0xff] %vm602, %v1048
      %1061 = vst [vmem:[#allocation4 + $0xa8] sm:$0xff] %v1049
      %1062 = vst [vmem:[#allocation4 + $0xb0] sm:$0xff] %v1050
      %1063 = vst.msk [vmem:[#allocation4 + $0xb8] sm:$0xff] %vm602, %v1051
      %v1064 = vld [vmem:[#allocation2] sm:$0xff]
      %v1065 = vld [vmem:[#allocation2 + $0x8] sm:$0xff]
      %v1066 = vld [vmem:[#allocation2 + $0x10] sm:$0xff]
      %v1067 = vld [vmem:[#allocation2 + $0x18] sm:$0xff]
      %v1068 = vld [vmem:[#allocation2 + $0x20] sm:$0xff]
      %v1069 = vld [vmem:[#allocation2 + $0x28] sm:$0xff]
      %v1070 = vld [vmem:[#allocation2 + $0x30] sm:$0xff]
      %v1071 = vld [vmem:[#allocation2 + $0x38] sm:$0xff]
      %1080 = vrot.lane.b32.xlu0 %v1064, 59
      %v1081 = vpop.permute.xlu0 %1080
      %1082 = vrot.lane.b32.xlu0 %v1065, 59
      %v1083 = vpop.permute.xlu0 %1082
      %1084 = vrot.lane.b32.xlu0 %v1066, 59
      %v1085 = vpop.permute.xlu0 %1084
      %1086 = vrot.lane.b32.xlu0 %v1067, 59
      %v1087 = vpop.permute.xlu0 %1086
      %1088 = vrot.lane.b32.xlu0 %v1068, 59
      %v1089 = vpop.permute.xlu0 %1088
      %1090 = vrot.lane.b32.xlu0 %v1069, 59
      %v1091 = vpop.permute.xlu0 %1090
      %1092 = vrot.lane.b32.xlu0 %v1070, 59
      %v1093 = vpop.permute.xlu0 %1092
      %1094 = vrot.lane.b32.xlu0 %v1071, 59
      %v1095 = vpop.permute.xlu0 %1094
      %vm1096 = vcmask 482304
      %v1097 = vsel %vm1096, %v1081, %v1083
      %v1098 = vsel %vm1096, %v1083, %v1085
      %v1099 = vsel %vm1096, %v1085, %v1087
      %v1100 = vsel %vm1096, %v1089, %v1091
      %v1101 = vsel %vm1096, %v1091, %v1093
      %v1102 = vsel %vm1096, %v1093, %v1095
      %1109 = vst [vmem:[#allocation4 + $0xc0] sm:$0xff] %v1097
      %1110 = vst [vmem:[#allocation4 + $0xc8] sm:$0xff] %v1098
      %1111 = vst.msk [vmem:[#allocation4 + $0xd0] sm:$0xff] %vm602, %v1099
      %1112 = vst [vmem:[#allocation4 + $0xd8] sm:$0xff] %v1100
      %1113 = vst [vmem:[#allocation4 + $0xe0] sm:$0xff] %v1101
      %1114 = vst.msk [vmem:[#allocation4 + $0xe8] sm:$0xff] %vm602, %v1102
      %v1115 = vld [vmem:[%s4] sm:$0xff]
      %v1116 = vld [vmem:[%s4 + $0x8] sm:$0xff]
      %v1117 = vld [vmem:[%s4 + $0x10] sm:$0xff]
      %v1118 = vld [vmem:[%s4 + $0x18] sm:$0xff]
      %v1119 = vld [vmem:[#allocation4] sm:$0xff]
      %v1120 = vld [vmem:[#allocation4 + $0x8] sm:$0xff]
      %v1121 = vld [vmem:[#allocation4 + $0x10] sm:$0xff]
      %v1122 = vld [vmem:[#allocation4 + $0x18] sm:$0xff]
      %v1123 = vld [vmem:[#allocation4 + $0x20] sm:$0xff]
      %v1124 = vld [vmem:[#allocation4 + $0x28] sm:$0xff]
      %v1125 = vld [vmem:[#allocation4 + $0x30] sm:$0xff]
      %v1126 = vld [vmem:[#allocation4 + $0x38] sm:$0xff]
      %v1127 = vld [vmem:[#allocation4 + $0x40] sm:$0xff]
      %v1128 = vld [vmem:[#allocation4 + $0x48] sm:$0xff]
      %v1129 = vld [vmem:[#allocation4 + $0x50] sm:$0xff]
      %v1130 = vld [vmem:[#allocation4 + $0x58] sm:$0xff]
      %v1131 = vld [vmem:[#allocation4 + $0x60] sm:$0xff]
      %v1132 = vld [vmem:[#allocation4 + $0x68] sm:$0xff]
      %v1133 = vld [vmem:[#allocation4 + $0x70] sm:$0xff]
      %v1134 = vld [vmem:[#allocation4 + $0x78] sm:$0xff]
      %v1135 = vld [vmem:[#allocation4 + $0x80] sm:$0xff]
      %v1136 = vld [vmem:[#allocation4 + $0x88] sm:$0xff]
      %v1137 = vld [vmem:[#allocation4 + $0x90] sm:$0xff]
      %v1138 = vld [vmem:[#allocation4 + $0x98] sm:$0xff]
      %v1139 = vld [vmem:[#allocation4 + $0xa0] sm:$0xff]
      %v1140 = vld [vmem:[#allocation4 + $0xa8] sm:$0xff]
      %v1141 = vld [vmem:[#allocation4 + $0xb0] sm:$0xff]
      %v1142 = vld [vmem:[#allocation4 + $0xb8] sm:$0xff]
      %v1143 = vld [vmem:[#allocation4 + $0xc0] sm:$0xff]
      %v1144 = vld [vmem:[#allocation4 + $0xc8] sm:$0xff]
      %v1145 = vld [vmem:[#allocation4 + $0xd0] sm:$0xff]
      %v1146 = vld [vmem:[#allocation4 + $0xd8] sm:$0xff]
      %v1147 = vld [vmem:[#allocation4 + $0xe0] sm:$0xff]
      %v1148 = vld [vmem:[#allocation4 + $0xe8] sm:$0xff]
      %v1149 = vld [vmem:[%s5] sm:$0xff]
      %v1150 = vld [vmem:[%s5 + $0x8] sm:$0xff]
      %v1151 = vld [vmem:[%s5 + $0x10] sm:$0xff]
      %v1152 = vld [vmem:[%s5 + $0x18] sm:$0xff]
      %1154 = vset.pattern.permute.xlu0 0
      %1155 = vperm.xlu0 %1154, %v1149
      %v1156 = vpop.permute.xlu0 %1155
      %1159 = vset.pattern.permute.xlu0 0
      %1160 = vperm.xlu0 %1159, %v1150
      %v1161 = vpop.permute.xlu0 %1160
      %1164 = vset.pattern.permute.xlu0 0
      %1165 = vperm.xlu0 %1164, %v1151
      %v1166 = vpop.permute.xlu0 %1165
      %1169 = vset.pattern.permute.xlu0 0
      %1170 = vperm.xlu0 %1169, %v1152
      %v1171 = vpop.permute.xlu0 %1170
      %v1177 = vunpack.c.l.b16 %v1115
      %v1178 = vunpack.c.h.b16 %v1115
      %v1179 = vunpack.c.l.b16 %v1116
      %v1180 = vunpack.c.h.b16 %v1116
      %v1181 = vunpack.c.l.b16 %v1117
      %v1182 = vunpack.c.h.b16 %v1117
      %v1183 = vunpack.c.l.b16 %v1118
      %v1184 = vunpack.c.h.b16 %v1118
      %v1185 = vpack.c.b16 %v1179, %v1177
      %v1186 = vpack.c.b16 %v1180, %v1178
      %v1187 = vpack.c.b16 %v1183, %v1181
      %v1188 = vpack.c.b16 %v1184, %v1182
      %v1192 = vsel %vm660, %v1186, 0
      %v1195 = vsel %vm660, %v1188, 0
      %1197 = vmatprep.subr.bf16.mxu0 %v1120
      %1198 = vmatpush1.bf16.msra.mxu0 %v1119
      %1199 = vmatprep.subr.bf16.mxu0 %v1123
      %1200 = vmatpush1.bf16.msra.mxu0 %v1122
      %1201 = vmatprep.subr.bf16.mxu0 %v1126
      %1202 = vmatpush1.bf16.msra.mxu0 %v1125
      %1203 = vmatprep.subr.bf16.mxu0 %v1129
      %1204 = vmatpush1.bf16.msra.mxu0 %v1128
      %1205 = vmatprep.subr.bf16.mxu0 %v1132
      %1206 = vmatpush1.bf16.msra.mxu0 %v1131
      %1207 = vmatprep.subr.bf16.mxu0 %v1135
      %1208 = vmatpush1.bf16.msra.mxu0 %v1134
      %1209 = vmatprep.subr.bf16.mxu0 %v1138
      %1210 = vmatpush1.bf16.msra.mxu0 %v1137
      %1211 = vmatprep.subr.bf16.mxu0 %v1141
      %1212 = vmatpush1.bf16.msra.mxu0 %v1140
      %1213 = vmatprep.subr.bf16.mxu0 %v1144
      %1214 = vmatpush1.bf16.msra.mxu0 %v1143
      %1215 = vmatprep.subr.bf16.mxu0 %v1147
      %1216 = vmatpush1.bf16.msra.mxu0 %v1146
      %1217 = vmatprep.subr.bf16.mxu0 0
      %1218 = vmatpush1.bf16.msra.mxu0 0
      %1219 = vmatprep.subr.bf16.mxu0 0
      %1220 = vmatpush1.bf16.msra.mxu0 0
      %1221 = vmatprep.subr.bf16.mxu0 0
      %1222 = vmatpush1.bf16.msra.mxu0 0
      %1223 = vmatprep.subr.bf16.mxu0 0
      %1224 = vmatpush1.bf16.msra.mxu0 0
      %1225 = vmatprep.subr.bf16.mxu0 0
      %1226 = vmatpush1.bf16.msra.mxu0 0
      %1227 = vmatprep.subr.bf16.mxu0 0
      %1228 = vmatpush1.bf16.msra.mxu0 0
      %1229 = vmatprep.mubr.bf16.mxu0 %v1192
      %1230 = vmatmul.mubr.bf16.gmra.mrb[0].mxu0 %v1185
      %v1231 = vpop.f32.mrb[0].mxu0
      %v1232 = vadd.f32 %v1156, %v1231
      %v1233 = vpop.f32.mrb[0].mxu0
      %v1234 = vadd.f32 %v1156, %v1233
      %v1235 = vpop.f32.mrb[0].mxu0
      %v1236 = vadd.f32 %v1161, %v1235
      %v1237 = vpop.f32.mrb[0].mxu0
      %v1238 = vadd.f32 %v1161, %v1237
      %1239 = vmatprep.mubr.bf16.mxu0 %v1195
      %1240 = vmatmul.mubr.bf16.gmra.mrb[0].mxu0 %v1187
      %v1241 = vpop.f32.mrb[0].mxu0
      %v1242 = vadd.f32 %v1166, %v1241
      %v1243 = vpop.f32.mrb[0].mxu0
      %v1244 = vadd.f32 %v1166, %v1243
      %v1245 = vpop.f32.mrb[0].mxu0
      %v1246 = vadd.f32 %v1171, %v1245
      %v1247 = vpop.f32.mrb[0].mxu0
      %v1248 = vadd.f32 %v1171, %v1247
      %1249 = vdwg.mxu0
      %1250 = vmatprep.subr.bf16.mxu0 0
      %1251 = vmatpush1.bf16.msra.mxu0 %v1121
      %1252 = vmatprep.subr.bf16.mxu0 0
      %1253 = vmatpush1.bf16.msra.mxu0 %v1124
      %1254 = vmatprep.subr.bf16.mxu0 0
      %1255 = vmatpush1.bf16.msra.mxu0 %v1127
      %1256 = vmatprep.subr.bf16.mxu0 0
      %1257 = vmatpush1.bf16.msra.mxu0 %v1130
      %1258 = vmatprep.subr.bf16.mxu0 0
      %1259 = vmatpush1.bf16.msra.mxu0 %v1133
      %1260 = vmatprep.subr.bf16.mxu0 0
      %1261 = vmatpush1.bf16.msra.mxu0 %v1136
      %1262 = vmatprep.subr.bf16.mxu0 0
      %1263 = vmatpush1.bf16.msra.mxu0 %v1139
      %1264 = vmatprep.subr.bf16.mxu0 0
      %1265 = vmatpush1.bf16.msra.mxu0 %v1142
      %1266 = vmatprep.subr.bf16.mxu0 0
      %1267 = vmatpush1.bf16.msra.mxu0 %v1145
      %1268 = vmatprep.subr.bf16.mxu0 0
      %1269 = vmatpush1.bf16.msra.mxu0 %v1148
      %1270 = vmatprep.subr.bf16.mxu0 0
      %1271 = vmatpush1.bf16.msra.mxu0 0
      %1272 = vmatprep.subr.bf16.mxu0 0
      %1273 = vmatpush1.bf16.msra.mxu0 0
      %1274 = vmatprep.subr.bf16.mxu0 0
      %1275 = vmatpush1.bf16.msra.mxu0 0
      %1276 = vmatprep.subr.bf16.mxu0 0
      %1277 = vmatpush1.bf16.msra.mxu0 0
      %1278 = vmatprep.subr.bf16.mxu0 0
      %1279 = vmatpush1.bf16.msra.mxu0 0
      %1280 = vmatprep.subr.bf16.mxu0 0
      %1281 = vmatpush1.bf16.msra.mxu0 0
      %1282 = vmatprep.mubr.bf16.mxu0 %v1192
      %1283 = vmatmul.mubr.bf16.gmra.mrb[0].mxu0 %v1185
      %v1284 = vpop.f32.mrb[0].mxu0
      %v1285 = vadd.f32 %v1156, %v1284
      %v1286 = vpop.f32.mrb[0].mxu0
      %v1287 = vpop.f32.mrb[0].mxu0
      %v1288 = vadd.f32 %v1161, %v1287
      %v1289 = vpop.f32.mrb[0].mxu0
      %1290 = vmatprep.mubr.bf16.mxu0 %v1195
      %1291 = vmatmul.mubr.bf16.gmra.mrb[0].mxu0 %v1187
      %v1292 = vpop.f32.mrb[0].mxu0
      %v1293 = vadd.f32 %v1166, %v1292
      %v1294 = vpop.f32.mrb[0].mxu0
      %v1295 = vpop.f32.mrb[0].mxu0
      %v1296 = vadd.f32 %v1171, %v1295
      %v1297 = vpop.f32.mrb[0].mxu0
      %1298 = vdwg.mxu0
      %v1299 = vmax.f32 %v1232, 0.0
      %v1300 = vmax.f32 %v1234, 0.0
      %v1301 = vmax.f32 %v1285, 0.0
      %v1302 = vmax.f32 %v1236, 0.0
      %v1303 = vmax.f32 %v1238, 0.0
      %v1304 = vmax.f32 %v1288, 0.0
      %v1305 = vmax.f32 %v1242, 0.0
      %v1306 = vmax.f32 %v1244, 0.0
      %v1307 = vmax.f32 %v1293, 0.0
      %v1308 = vmax.f32 %v1246, 0.0
      %v1309 = vmax.f32 %v1248, 0.0
      %v1310 = vmax.f32 %v1296, 0.0
      %v1311 = vld [vmem:[%s6] sm:$0xf]
      %v1312 = vld [vmem:[%s6 + $0x4] sm:$0x3]
      %v1313 = vpack.c.bf16 %v1302, %v1299
      %v1314 = vpack.c.bf16 %v1303, %v1300
      %v1315 = vpack.c.bf16 %v1304, %v1301
      %v1316 = vpack.c.bf16 %v1308, %v1305
      %v1317 = vpack.c.bf16 %v1309, %v1306
      %v1318 = vpack.c.bf16 %v1310, %v1307
      %v1319 = vld [vmem:[%s7] sm:$0xff]
      %v1320 = vld [vmem:[%s7 + $0x8] sm:$0xf]
      %1322 = vset.pattern.permute.xlu0 0
      %1323 = vperm.xlu0 %1322, %v1319
      %v1324 = vpop.permute.xlu0 %1323
      %1327 = vset.pattern.permute.xlu0 0
      %1328 = vperm.xlu0 %1327, %v1320
      %v1329 = vpop.permute.xlu0 %1328
      %v1333 = vunpack.c.l.b16 %v1311
      %v1334 = vunpack.c.l.b16 %v1312
      %v1335 = vpack.c.b16 %v1334, %v1333
      %v1337 = vsel %vm660, %v1335, 0
      %1339 = vmatprep.subr.bf16.mxu0 %v1314
      %1340 = vmatpush1.bf16.msra.mxu0 %v1313
      %1341 = vmatprep.subr.bf16.mxu0 %v1317
      %1342 = vmatpush1.bf16.msra.mxu0 %v1316
      %1343 = vmatprep.subr.bf16.mxu0 0
      %1344 = vmatpush1.bf16.msra.mxu0 0
      %1345 = vmatprep.subr.bf16.mxu0 0
      %1346 = vmatpush1.bf16.msra.mxu0 0
      %1347 = vmatprep.subr.bf16.mxu0 0
      %1348 = vmatpush1.bf16.msra.mxu0 0
      %1349 = vmatprep.subr.bf16.mxu0 0
      %1350 = vmatpush1.bf16.msra.mxu0 0
      %1351 = vmatprep.subr.bf16.mxu0 0
      %1352 = vmatpush1.bf16.msra.mxu0 0
      %1353 = vmatprep.subr.bf16.mxu0 0
      %1354 = vmatpush1.bf16.msra.mxu0 0
      %1355 = vmatprep.subr.bf16.mxu0 0
      %1356 = vmatpush1.bf16.msra.mxu0 0
      %1357 = vmatprep.subr.bf16.mxu0 0
      %1358 = vmatpush1.bf16.msra.mxu0 0
      %1359 = vmatprep.subr.bf16.mxu0 0
      %1360 = vmatpush1.bf16.msra.mxu0 0
      %1361 = vmatprep.subr.bf16.mxu0 0
      %1362 = vmatpush1.bf16.msra.mxu0 0
      %1363 = vmatprep.subr.bf16.mxu0 0
      %1364 = vmatpush1.bf16.msra.mxu0 0
      %1365 = vmatprep.subr.bf16.mxu0 0
      %1366 = vmatpush1.bf16.msra.mxu0 0
      %1367 = vmatprep.subr.bf16.mxu0 0
      %1368 = vmatpush1.bf16.msra.mxu0 0
      %1369 = vmatprep.subr.bf16.mxu0 0
      %1370 = vmatpush1.bf16.msra.mxu0 0
      %1371 = vmatprep.mubr.bf16.mxu0 0
      %1372 = vmatmul.mubr.bf16.gmra.mrb[0].mxu0 %v1337
      %v1373 = vpop.f32.mrb[0].mxu0
      %v1374 = vadd.f32 %v1324, %v1373
      %v1375 = vpop.f32.mrb[0].mxu0
      %v1376 = vadd.f32 %v1324, %v1375
      %v1377 = vpop.f32.mrb[0].mxu0
      %v1378 = vadd.f32 %v1329, %v1377
      %v1379 = vpop.f32.mrb[0].mxu0
      %v1380 = vadd.f32 %v1329, %v1379
      %1381 = vdwg.mxu0
      %1382 = vmatprep.subr.bf16.mxu0 0
      %1383 = vmatpush1.bf16.msra.mxu0 %v1315
      %1384 = vmatprep.subr.bf16.mxu0 0
      %1385 = vmatpush1.bf16.msra.mxu0 %v1318
      %1386 = vmatprep.subr.bf16.mxu0 0
      %1387 = vmatpush1.bf16.msra.mxu0 0
      %1388 = vmatprep.subr.bf16.mxu0 0
      %1389 = vmatpush1.bf16.msra.mxu0 0
      %1390 = vmatprep.subr.bf16.mxu0 0
      %1391 = vmatpush1.bf16.msra.mxu0 0
      %1392 = vmatprep.subr.bf16.mxu0 0
      %1393 = vmatpush1.bf16.msra.mxu0 0
      %1394 = vmatprep.subr.bf16.mxu0 0
      %1395 = vmatpush1.bf16.msra.mxu0 0
      %1396 = vmatprep.subr.bf16.mxu0 0
      %1397 = vmatpush1.bf16.msra.mxu0 0
      %1398 = vmatprep.subr.bf16.mxu0 0
      %1399 = vmatpush1.bf16.msra.mxu0 0
      %1400 = vmatprep.subr.bf16.mxu0 0
      %1401 = vmatpush1.bf16.msra.mxu0 0
      %1402 = vmatprep.subr.bf16.mxu0 0
      %1403 = vmatpush1.bf16.msra.mxu0 0
      %1404 = vmatprep.subr.bf16.mxu0 0
      %1405 = vmatpush1.bf16.msra.mxu0 0
      %1406 = vmatprep.subr.bf16.mxu0 0
      %1407 = vmatpush1.bf16.msra.mxu0 0
      %1408 = vmatprep.subr.bf16.mxu0 0
      %1409 = vmatpush1.bf16.msra.mxu0 0
      %1410 = vmatprep.subr.bf16.mxu0 0
      %1411 = vmatpush1.bf16.msra.mxu0 0
      %1412 = vmatprep.subr.bf16.mxu0 0
      %1413 = vmatpush1.bf16.msra.mxu0 0
      %1414 = vmatprep.mubr.bf16.mxu0 0
      %1415 = vmatmul.mubr.bf16.gmra.mrb[0].mxu0 %v1337
      %v1416 = vpop.f32.mrb[0].mxu0
      %v1417 = vadd.f32 %v1324, %v1416
      %v1418 = vpop.f32.mrb[0].mxu0
      %v1419 = vpop.f32.mrb[0].mxu0
      %v1420 = vadd.f32 %v1329, %v1419
      %v1421 = vpop.f32.mrb[0].mxu0
      %1422 = vdwg.mxu0
      %v1426 = vcombine.low %v1374, %v1376
      %v1428 = vunpack.c.l.s4 1966171168
      %v1429 = vunpack.c.0.s8 %v1428
      %v1430 = vlaneseq
      %v1431 = vshrl.u32 %v1430, 7
      %v1432 = vsub.s32 %v1429, %v1431
      %v1433 = vrot.slane %v1426, %v1432
      %v1435 = vunpack.c.l.s4 1966171168
      %v1436 = vunpack.c.0.s8 %v1435
      %v1437 = vlaneseq
      %v1438 = vshrl.u32 %v1437, 7
      %v1439 = vsub.s32 %v1436, %v1438
      %v1440 = vrot.slane %v1417, %v1439
      %v1441 = vcombine.low %v1433, %v1440
      %v1442 = vcombine.high %v1433, %v1440
      %v1444 = vunpack.c.l.s4 1966171168
      %v1445 = vunpack.c.0.s8 %v1444
      %v1446 = vlaneseq
      %v1447 = vshrl.u32 %v1446, 7
      %v1448 = vsub.s32 %v1445, %v1447
      %v1449 = vrot.slane %v1441, %v1448
      %v1451 = vunpack.c.l.s4 1966171168
      %v1452 = vunpack.c.0.s8 %v1451
      %v1453 = vlaneseq
      %v1454 = vshrl.u32 %v1453, 7
      %v1455 = vsub.s32 %v1452, %v1454
      %v1456 = vrot.slane %v1442, %v1455
      %v1457 = vcombine.high %v1449, %v1449
      %v1458 = vcombine.high %v1456, %v1456
      %v1463 = vcombine.high %v1374, %v1376
      %v1464 = vcombine.high %v1417, %v1417
      %v1466 = vunpack.c.l.s4 1966171168
      %v1467 = vunpack.c.0.s8 %v1466
      %v1468 = vlaneseq
      %v1469 = vshrl.u32 %v1468, 7
      %v1470 = vsub.s32 %v1467, %v1469
      %v1471 = vrot.slane %v1463, %v1470
      %v1473 = vunpack.c.l.s4 1966171168
      %v1474 = vunpack.c.0.s8 %v1473
      %v1475 = vlaneseq
      %v1476 = vshrl.u32 %v1475, 7
      %v1477 = vsub.s32 %v1474, %v1476
      %v1478 = vrot.slane %v1464, %v1477
      %v1479 = vcombine.low %v1471, %v1478
      %v1480 = vcombine.high %v1471, %v1478
      %v1482 = vunpack.c.l.s4 1966171168
      %v1483 = vunpack.c.0.s8 %v1482
      %v1484 = vlaneseq
      %v1485 = vshrl.u32 %v1484, 7
      %v1486 = vsub.s32 %v1483, %v1485
      %v1487 = vrot.slane %v1479, %v1486
      %v1489 = vunpack.c.l.s4 1966171168
      %v1490 = vunpack.c.0.s8 %v1489
      %v1491 = vlaneseq
      %v1492 = vshrl.u32 %v1491, 7
      %v1493 = vsub.s32 %v1490, %v1492
      %v1494 = vrot.slane %v1480, %v1493
      %v1495 = vcombine.high %v1487, %v1487
      %v1496 = vcombine.high %v1494, %v1494
      %v1500 = vcombine.low %v1378, %v1380
      %v1502 = vunpack.c.l.s4 1966171168
      %v1503 = vunpack.c.0.s8 %v1502
      %v1504 = vlaneseq
      %v1505 = vshrl.u32 %v1504, 7
      %v1506 = vsub.s32 %v1503, %v1505
      %v1507 = vrot.slane %v1500, %v1506
      %v1509 = vunpack.c.l.s4 1966171168
      %v1510 = vunpack.c.0.s8 %v1509
      %v1511 = vlaneseq
      %v1512 = vshrl.u32 %v1511, 7
      %v1513 = vsub.s32 %v1510, %v1512
      %v1514 = vrot.slane %v1420, %v1513
      %v1515 = vcombine.low %v1507, %v1514
      %v1516 = vcombine.high %v1507, %v1514
      %v1518 = vunpack.c.l.s4 1966171168
      %v1519 = vunpack.c.0.s8 %v1518
      %v1520 = vlaneseq
      %v1521 = vshrl.u32 %v1520, 7
      %v1522 = vsub.s32 %v1519, %v1521
      %v1523 = vrot.slane %v1515, %v1522
      %v1525 = vunpack.c.l.s4 1966171168
      %v1526 = vunpack.c.0.s8 %v1525
      %v1527 = vlaneseq
      %v1528 = vshrl.u32 %v1527, 7
      %v1529 = vsub.s32 %v1526, %v1528
      %v1530 = vrot.slane %v1516, %v1529
      %v1531 = vcombine.high %v1523, %v1523
      %v1532 = vcombine.high %v1530, %v1530
      %v1537 = vld [vmem:[%s330] sm:$0xf]
      %v1538 = vsel %vm344, %v1449, -inf
      %v1539 = vsel %vm344, %v1456, -inf
      %v1540 = vsel %vm344, %v1457, -inf
      %v1541 = vsel %vm344, %v1458, -inf
      %v1542 = vmax.f32 %v1538, %v1539
      %v1543 = vmax.f32 %v1540, %v1541
      %v1544 = vmax.f32 %v1542, %v1543
      %v1545 = vsub.f32 %v1449, %v1544
      %v1546 = vsub.f32 %v1456, %v1544
      %v1547 = vsub.f32 %v1457, %v1544
      %v1548 = vsub.f32 %v1458, %v1544
      %v1549 = vmul.f32 %v1545, 1.442695
      %v1550 = vpow.pop %v1549
      %v1551 = vmul.f32 %v1546, 1.442695
      %v1552 = vpow.pop %v1551
      %v1553 = vmul.f32 %v1547, 1.442695
      %v1554 = vpow.pop %v1553
      %v1555 = vmul.f32 %v1548, 1.442695
      %v1556 = vpow.pop %v1555
      %v1561 = vlaneseq
      %v1562 = vshrl.u32 %v1561, 7
      %v1563 = vsub.s32 0, %v1562
      %v1564 = vrot.slane %v1550, %v1563
      %v1565 = vlaneseq
      %v1566 = vshrl.u32 %v1565, 7
      %v1567 = vsub.s32 1, %v1566
      %v1568 = vrot.slane %v1550, %v1567
      %v1569 = vlaneseq
      %v1570 = vshrl.u32 %v1569, 7
      %v1571 = vsub.s32 2, %v1570
      %v1572 = vrot.slane %v1550, %v1571
      %v1573 = vlaneseq
      %v1574 = vshrl.u32 %v1573, 7
      %v1575 = vsub.s32 0, %v1574
      %v1576 = vrot.slane %v1552, %v1575
      %v1577 = vlaneseq
      %v1578 = vshrl.u32 %v1577, 7
      %v1579 = vsub.s32 1, %v1578
      %v1580 = vrot.slane %v1552, %v1579
      %v1581 = vlaneseq
      %v1582 = vshrl.u32 %v1581, 7
      %v1583 = vsub.s32 2, %v1582
      %v1584 = vrot.slane %v1552, %v1583
      %v1585 = vlaneseq
      %v1586 = vshrl.u32 %v1585, 7
      %v1587 = vsub.s32 0, %v1586
      %v1588 = vrot.slane %v1554, %v1587
      %v1589 = vlaneseq
      %v1590 = vshrl.u32 %v1589, 7
      %v1591 = vsub.s32 1, %v1590
      %v1592 = vrot.slane %v1554, %v1591
      %v1593 = vlaneseq
      %v1594 = vshrl.u32 %v1593, 7
      %v1595 = vsub.s32 2, %v1594
      %v1596 = vrot.slane %v1554, %v1595
      %v1597 = vlaneseq
      %v1598 = vshrl.u32 %v1597, 7
      %v1599 = vsub.s32 0, %v1598
      %v1600 = vrot.slane %v1556, %v1599
      %v1601 = vlaneseq
      %v1602 = vshrl.u32 %v1601, 7
      %v1603 = vsub.s32 1, %v1602
      %v1604 = vrot.slane %v1556, %v1603
      %v1605 = vlaneseq
      %v1606 = vshrl.u32 %v1605, 7
      %v1607 = vsub.s32 2, %v1606
      %v1608 = vrot.slane %v1556, %v1607
      %vm1621 = vcmask 1040384
      %v1622 = vsel %vm1621, %v1564, 0.0
      %v1623 = vsel %vm1621, %v1576, 0.0
      %v1624 = vadd.f32 %v1622, %v1623
      %v1625 = vsel %vm1621, %v1588, 0.0
      %v1626 = vadd.f32 %v1624, %v1625
      %v1627 = vsel %vm1621, %v1600, 0.0
      %v1628 = vadd.f32 %v1626, %v1627
      %v1629 = vsel %vm1621, %v1568, 0.0
      %v1630 = vsel %vm1621, %v1580, 0.0
      %v1631 = vadd.f32 %v1629, %v1630
      %v1632 = vsel %vm1621, %v1592, 0.0
      %v1633 = vadd.f32 %v1631, %v1632
      %v1634 = vsel %vm1621, %v1604, 0.0
      %v1635 = vadd.f32 %v1633, %v1634
      %vm1636 = vcmask 778240
      %v1637 = vsel %vm1636, %v1572, 0.0
      %v1638 = vsel %vm1636, %v1584, 0.0
      %v1639 = vadd.f32 %v1637, %v1638
      %v1640 = vsel %vm1636, %v1596, 0.0
      %v1641 = vadd.f32 %v1639, %v1640
      %v1642 = vsel %vm1636, %v1608, 0.0
      %v1643 = vadd.f32 %v1641, %v1642
      %v1647 = vcombine.low %v1628, %v1635
      %v1649 = vunpack.c.l.s4 1966171168
      %v1650 = vunpack.c.0.s8 %v1649
      %v1651 = vlaneseq
      %v1652 = vshrl.u32 %v1651, 7
      %v1653 = vsub.s32 %v1650, %v1652
      %v1654 = vrot.slane %v1647, %v1653
      %v1656 = vunpack.c.l.s4 1966171168
      %v1657 = vunpack.c.0.s8 %v1656
      %v1658 = vlaneseq
      %v1659 = vshrl.u32 %v1658, 7
      %v1660 = vsub.s32 %v1657, %v1659
      %v1661 = vrot.slane %v1643, %v1660
      %v1662 = vcombine.low %v1654, %v1661
      %v1664 = vunpack.c.l.s4 1966171168
      %v1665 = vunpack.c.0.s8 %v1664
      %v1666 = vlaneseq
      %v1667 = vshrl.u32 %v1666, 7
      %v1668 = vsub.s32 %v1665, %v1667
      %v1669 = vrot.slane %v1662, %v1668
      %v1671 = vrcp.pop %v1669
      %v1672 = vmul.f32 %v1550, %v1671
      %v1673 = vmul.f32 %v1552, %v1671
      %v1674 = vmul.f32 %v1554, %v1671
      %v1675 = vmul.f32 %v1556, %v1671
      %v1676 = vsub.f32 0.0, %v1523
      %v1677 = vsub.f32 0.0, %v1530
      %v1678 = vsub.f32 0.0, %v1531
      %v1679 = vsub.f32 0.0, %v1532
      %v1680 = vmul.f32 %v1676, 1.442695
      %v1681 = vpow.pop %v1680
      %v1682 = vmul.f32 %v1677, 1.442695
      %v1683 = vpow.pop %v1682
      %v1684 = vmul.f32 %v1678, 1.442695
      %v1685 = vpow.pop %v1684
      %v1686 = vmul.f32 %v1679, 1.442695
      %v1687 = vpow.pop %v1686
      %1688 = vrot.lane.b32.xlu0 %v1487, 69
      %v1689 = vpop.permute.xlu0 %1688
      %1690 = vrot.lane.b32.xlu0 %v1494, 69
      %v1691 = vpop.permute.xlu0 %1690
      %1692 = vrot.lane.b32.xlu0 %v1495, 69
      %v1693 = vpop.permute.xlu0 %1692
      %1694 = vrot.lane.b32.xlu0 %v1496, 69
      %v1695 = vpop.permute.xlu0 %1694
      %v1696 = vrot.slane %v1689, 7
      %v1697 = vrot.slane %v1691, 7
      %v1698 = vrot.slane %v1693, 7
      %v1699 = vrot.slane %v1695, 7
      %v1700 = vsel %vm810, %v1696, %v1689
      %v1701 = vsel %vm810, %v1697, %v1691
      %v1702 = vsel %vm810, %v1698, %v1693
      %v1703 = vsel %vm810, %v1699, %v1695
      %v1708 = vsub.f32 %v1537, %v1700
      %v1709 = vsub.f32 %v1537, %v1701
      %v1710 = vsub.f32 %v1537, %v1702
      %v1711 = vsub.f32 %v1537, %v1703
      %1716 = vrot.lane.b32.xlu0 %v1681, 69
      %v1717 = vpop.permute.xlu0 %1716
      %1718 = vrot.lane.b32.xlu0 %v1683, 69
      %v1719 = vpop.permute.xlu0 %1718
      %1720 = vrot.lane.b32.xlu0 %v1685, 69
      %v1721 = vpop.permute.xlu0 %1720
      %1722 = vrot.lane.b32.xlu0 %v1687, 69
      %v1723 = vpop.permute.xlu0 %1722
      %v1724 = vrot.slane %v1717, 7
      %v1725 = vrot.slane %v1719, 7
      %v1726 = vrot.slane %v1721, 7
      %v1727 = vrot.slane %v1723, 7
      %v1728 = vsel %vm810, %v1724, %v1717
      %v1729 = vsel %vm810, %v1725, %v1719
      %v1730 = vsel %vm810, %v1726, %v1721
      %v1731 = vsel %vm810, %v1727, %v1723
      %v1736 = vmul.f32 %v1708, %v1728
      %v1737 = vmul.f32 %v1709, %v1729
      %v1738 = vmul.f32 %v1710, %v1730
      %v1739 = vmul.f32 %v1711, %v1731
      %v1740 = vmul.f32 %v1736, 0.70710677
      %v1741 = vmul.f32 %v1737, 0.70710677
      %v1742 = vmul.f32 %v1738, 0.70710677
      %v1743 = vmul.f32 %v1739, 0.70710677
      %v1744 = verf.f32.pop %v1740
      %v1745 = verf.f32.pop %v1741
      %v1746 = verf.f32.pop %v1742
      %v1747 = verf.f32.pop %v1743
      %v1748 = vadd.f32 %v1744, 1.0
      %v1749 = vadd.f32 %v1745, 1.0
      %v1750 = vadd.f32 %v1746, 1.0
      %v1751 = vadd.f32 %v1747, 1.0
      %v1752 = vmul.f32 %v1748, 0.5
      %v1753 = vmul.f32 %v1749, 0.5
      %v1754 = vmul.f32 %v1750, 0.5
      %v1755 = vmul.f32 %v1751, 0.5
      %v1756 = vmul.f32 %v1736, %v1736
      %v1757 = vmul.f32 %v1737, %v1737
      %v1758 = vmul.f32 %v1738, %v1738
      %v1759 = vmul.f32 %v1739, %v1739
      %v1760 = vmul.f32 %v1756, -0.5
      %v1761 = vmul.f32 %v1757, -0.5
      %v1762 = vmul.f32 %v1758, -0.5
      %v1763 = vmul.f32 %v1759, -0.5
      %v1764 = vmul.f32 %v1760, 1.442695
      %v1765 = vpow.pop %v1764
      %v1766 = vmul.f32 %v1761, 1.442695
      %v1767 = vpow.pop %v1766
      %v1768 = vmul.f32 %v1762, 1.442695
      %v1769 = vpow.pop %v1768
      %v1770 = vmul.f32 %v1763, 1.442695
      %v1771 = vpow.pop %v1770
      %v1772 = vmul.f32 %v1681, 0.3989423
      %v1773 = vmul.f32 %v1683, 0.3989423
      %v1774 = vmul.f32 %v1685, 0.3989423
      %v1775 = vmul.f32 %v1687, 0.3989423
      %1780 = vrot.lane.b32.xlu0 %v1772, 69
      %v1781 = vpop.permute.xlu0 %1780
      %1782 = vrot.lane.b32.xlu0 %v1773, 69
      %v1783 = vpop.permute.xlu0 %1782
      %1784 = vrot.lane.b32.xlu0 %v1774, 69
      %v1785 = vpop.permute.xlu0 %1784
      %1786 = vrot.lane.b32.xlu0 %v1775, 69
      %v1787 = vpop.permute.xlu0 %1786
      %v1788 = vrot.slane %v1781, 7
      %v1789 = vrot.slane %v1783, 7
      %v1790 = vrot.slane %v1785, 7
      %v1791 = vrot.slane %v1787, 7
      %v1792 = vsel %vm810, %v1788, %v1781
      %v1793 = vsel %vm810, %v1789, %v1783
      %v1794 = vsel %vm810, %v1790, %v1785
      %v1795 = vsel %vm810, %v1791, %v1787
      %v1800 = vmul.f32 %v1765, %v1792
      %v1801 = vmul.f32 %v1767, %v1793
      %v1802 = vmul.f32 %v1769, %v1794
      %v1803 = vmul.f32 %v1771, %v1795
      %1808 = vrot.lane.b32.xlu0 %v1752, 59
      %v1809 = vpop.permute.xlu0 %1808
      %1810 = vrot.lane.b32.xlu0 %v1753, 59
      %v1811 = vpop.permute.xlu0 %1810
      %1812 = vrot.lane.b32.xlu0 %v1754, 59
      %v1813 = vpop.permute.xlu0 %1812
      %1814 = vrot.lane.b32.xlu0 %v1755, 59
      %v1815 = vpop.permute.xlu0 %1814
      %v1816 = vrot.slane %v1809, 1
      %v1817 = vrot.slane %v1811, 1
      %v1818 = vrot.slane %v1813, 1
      %v1819 = vrot.slane %v1815, 1
      %vm1820 = vcmask 482304
      %v1821 = vsel %vm1820, %v1809, %v1816
      %v1822 = vsel %vm1820, %v1811, %v1817
      %v1823 = vsel %vm1820, %v1813, %v1818
      %v1824 = vsel %vm1820, %v1815, %v1819
      %v1829 = vmul.f32 %v1672, %v1821
      %v1830 = vmul.f32 %v1673, %v1822
      %v1831 = vmul.f32 %v1674, %v1823
      %v1832 = vmul.f32 %v1675, %v1824
      %v1837 = vlaneseq
      %v1838 = vshrl.u32 %v1837, 7
      %v1839 = vsub.s32 0, %v1838
      %v1840 = vrot.slane %v1829, %v1839
      %v1841 = vlaneseq
      %v1842 = vshrl.u32 %v1841, 7
      %v1843 = vsub.s32 1, %v1842
      %v1844 = vrot.slane %v1829, %v1843
      %v1845 = vlaneseq
      %v1846 = vshrl.u32 %v1845, 7
      %v1847 = vsub.s32 2, %v1846
      %v1848 = vrot.slane %v1829, %v1847
      %v1849 = vlaneseq
      %v1850 = vshrl.u32 %v1849, 7
      %v1851 = vsub.s32 0, %v1850
      %v1852 = vrot.slane %v1830, %v1851
      %v1853 = vlaneseq
      %v1854 = vshrl.u32 %v1853, 7
      %v1855 = vsub.s32 1, %v1854
      %v1856 = vrot.slane %v1830, %v1855
      %v1857 = vlaneseq
      %v1858 = vshrl.u32 %v1857, 7
      %v1859 = vsub.s32 2, %v1858
      %v1860 = vrot.slane %v1830, %v1859
      %v1861 = vlaneseq
      %v1862 = vshrl.u32 %v1861, 7
      %v1863 = vsub.s32 0, %v1862
      %v1864 = vrot.slane %v1831, %v1863
      %v1865 = vlaneseq
      %v1866 = vshrl.u32 %v1865, 7
      %v1867 = vsub.s32 1, %v1866
      %v1868 = vrot.slane %v1831, %v1867
      %v1869 = vlaneseq
      %v1870 = vshrl.u32 %v1869, 7
      %v1871 = vsub.s32 2, %v1870
      %v1872 = vrot.slane %v1831, %v1871
      %v1873 = vlaneseq
      %v1874 = vshrl.u32 %v1873, 7
      %v1875 = vsub.s32 0, %v1874
      %v1876 = vrot.slane %v1832, %v1875
      %v1877 = vlaneseq
      %v1878 = vshrl.u32 %v1877, 7
      %v1879 = vsub.s32 1, %v1878
      %v1880 = vrot.slane %v1832, %v1879
      %v1881 = vlaneseq
      %v1882 = vshrl.u32 %v1881, 7
      %v1883 = vsub.s32 2, %v1882
      %v1884 = vrot.slane %v1832, %v1883
      %v1897 = vsel %vm1621, %v1840, 0.0
      %v1898 = vsel %vm1621, %v1852, 0.0
      %v1899 = vadd.f32 %v1897, %v1898
      %v1900 = vsel %vm1621, %v1864, 0.0
      %v1901 = vadd.f32 %v1899, %v1900
      %v1902 = vsel %vm1621, %v1876, 0.0
      %v1903 = vadd.f32 %v1901, %v1902
      %v1904 = vsel %vm1621, %v1844, 0.0
      %v1905 = vsel %vm1621, %v1856, 0.0
      %v1906 = vadd.f32 %v1904, %v1905
      %v1907 = vsel %vm1621, %v1868, 0.0
      %v1908 = vadd.f32 %v1906, %v1907
      %v1909 = vsel %vm1621, %v1880, 0.0
      %v1910 = vadd.f32 %v1908, %v1909
      %v1911 = vsel %vm1636, %v1848, 0.0
      %v1912 = vsel %vm1636, %v1860, 0.0
      %v1913 = vadd.f32 %v1911, %v1912
      %v1914 = vsel %vm1636, %v1872, 0.0
      %v1915 = vadd.f32 %v1913, %v1914
      %v1916 = vsel %vm1636, %v1884, 0.0
      %v1917 = vadd.f32 %v1915, %v1916
      %v1918 = vmax.f32 %v1903, 0.0
      %v1919 = vmax.f32 %v1910, 0.0
      %v1920 = vmax.f32 %v1917, 0.0
      %v1921 = vmin.f32 %v1918, 1.0
      %v1922 = vmin.f32 %v1919, 1.0
      %v1923 = vmin.f32 %v1920, 1.0
      %v1927 = vcombine.low %v1921, %v1922
      %v1929 = vunpack.c.l.s4 1966171168
      %v1930 = vunpack.c.0.s8 %v1929
      %v1931 = vlaneseq
      %v1932 = vshrl.u32 %v1931, 7
      %v1933 = vsub.s32 %v1930, %v1932
      %v1934 = vrot.slane %v1927, %v1933
      %v1936 = vunpack.c.l.s4 1966171168
      %v1937 = vunpack.c.0.s8 %v1936
      %v1938 = vlaneseq
      %v1939 = vshrl.u32 %v1938, 7
      %v1940 = vsub.s32 %v1937, %v1939
      %v1941 = vrot.slane %v1923, %v1940
      %v1942 = vcombine.low %v1934, %v1941
      %v1944 = vunpack.c.l.s4 1966171168
      %v1945 = vunpack.c.0.s8 %v1944
      %v1946 = vlaneseq
      %v1947 = vshrl.u32 %v1946, 7
      %v1948 = vsub.s32 %v1945, %v1947
      %v1949 = vrot.slane %v1942, %v1948
      %1951 = vst.msk [vmem:[%s334] sm:$0x7] %vm344, %v1949
      %1956 = vrot.lane.b32.xlu0 %v1800, 59
      %v1957 = vpop.permute.xlu0 %1956
      %1958 = vrot.lane.b32.xlu0 %v1801, 59
      %v1959 = vpop.permute.xlu0 %1958
      %1960 = vrot.lane.b32.xlu0 %v1802, 59
      %v1961 = vpop.permute.xlu0 %1960
      %1962 = vrot.lane.b32.xlu0 %v1803, 59
      %v1963 = vpop.permute.xlu0 %1962
      %v1964 = vrot.slane %v1957, 1
      %v1965 = vrot.slane %v1959, 1
      %v1966 = vrot.slane %v1961, 1
      %v1967 = vrot.slane %v1963, 1
      %v1968 = vsel %vm1820, %v1957, %v1964
      %v1969 = vsel %vm1820, %v1959, %v1965
      %v1970 = vsel %vm1820, %v1961, %v1966
      %v1971 = vsel %vm1820, %v1963, %v1967
      %v1976 = vmul.f32 %v1672, %v1968
      %v1977 = vmul.f32 %v1673, %v1969
      %v1978 = vmul.f32 %v1674, %v1970
      %v1979 = vmul.f32 %v1675, %v1971
      %v1984 = vlaneseq
      %v1985 = vshrl.u32 %v1984, 7
      %v1986 = vsub.s32 0, %v1985
      %v1987 = vrot.slane %v1976, %v1986
      %v1988 = vlaneseq
      %v1989 = vshrl.u32 %v1988, 7
      %v1990 = vsub.s32 1, %v1989
      %v1991 = vrot.slane %v1976, %v1990
      %v1992 = vlaneseq
      %v1993 = vshrl.u32 %v1992, 7
      %v1994 = vsub.s32 2, %v1993
      %v1995 = vrot.slane %v1976, %v1994
      %v1996 = vlaneseq
      %v1997 = vshrl.u32 %v1996, 7
      %v1998 = vsub.s32 0, %v1997
      %v1999 = vrot.slane %v1977, %v1998
      %v2000 = vlaneseq
      %v2001 = vshrl.u32 %v2000, 7
      %v2002 = vsub.s32 1, %v2001
      %v2003 = vrot.slane %v1977, %v2002
      %v2004 = vlaneseq
      %v2005 = vshrl.u32 %v2004, 7
      %v2006 = vsub.s32 2, %v2005
      %v2007 = vrot.slane %v1977, %v2006
      %v2008 = vlaneseq
      %v2009 = vshrl.u32 %v2008, 7
      %v2010 = vsub.s32 0, %v2009
      %v2011 = vrot.slane %v1978, %v2010
      %v2012 = vlaneseq
      %v2013 = vshrl.u32 %v2012, 7
      %v2014 = vsub.s32 1, %v2013
      %v2015 = vrot.slane %v1978, %v2014
      %v2016 = vlaneseq
      %v2017 = vshrl.u32 %v2016, 7
      %v2018 = vsub.s32 2, %v2017
      %v2019 = vrot.slane %v1978, %v2018
      %v2020 = vlaneseq
      %v2021 = vshrl.u32 %v2020, 7
      %v2022 = vsub.s32 0, %v2021
      %v2023 = vrot.slane %v1979, %v2022
      %v2024 = vlaneseq
      %v2025 = vshrl.u32 %v2024, 7
      %v2026 = vsub.s32 1, %v2025
      %v2027 = vrot.slane %v1979, %v2026
      %v2028 = vlaneseq
      %v2029 = vshrl.u32 %v2028, 7
      %v2030 = vsub.s32 2, %v2029
      %v2031 = vrot.slane %v1979, %v2030
      %v2044 = vsel %vm1621, %v1987, 0.0
      %v2045 = vsel %vm1621, %v1999, 0.0
      %v2046 = vadd.f32 %v2044, %v2045
      %v2047 = vsel %vm1621, %v2011, 0.0
      %v2048 = vadd.f32 %v2046, %v2047
      %v2049 = vsel %vm1621, %v2023, 0.0
      %v2050 = vadd.f32 %v2048, %v2049
      %v2051 = vsel %vm1621, %v1991, 0.0
      %v2052 = vsel %vm1621, %v2003, 0.0
      %v2053 = vadd.f32 %v2051, %v2052
      %v2054 = vsel %vm1621, %v2015, 0.0
      %v2055 = vadd.f32 %v2053, %v2054
      %v2056 = vsel %vm1621, %v2027, 0.0
      %v2057 = vadd.f32 %v2055, %v2056
      %v2058 = vsel %vm1636, %v1995, 0.0
      %v2059 = vsel %vm1636, %v2007, 0.0
      %v2060 = vadd.f32 %v2058, %v2059
      %v2061 = vsel %vm1636, %v2019, 0.0
      %v2062 = vadd.f32 %v2060, %v2061
      %v2063 = vsel %vm1636, %v2031, 0.0
      %v2064 = vadd.f32 %v2062, %v2063
      %v2065 = vlog2.pop %v2050
      %v2066 = vmul.f32 %v2065, 0.6931472
      %v2067 = vlog2.pop %v2057
      %v2068 = vmul.f32 %v2067, 0.6931472
      %v2069 = vlog2.pop %v2064
      %v2070 = vmul.f32 %v2069, 0.6931472
      %v2071 = vsub.f32 %v2066, 0.6931472
      %v2072 = vsub.f32 %v2068, 0.6931472
      %v2073 = vsub.f32 %v2070, 0.6931472
      %v2077 = vcombine.low %v2071, %v2072
      %v2079 = vunpack.c.l.s4 1966171168
      %v2080 = vunpack.c.0.s8 %v2079
      %v2081 = vlaneseq
      %v2082 = vshrl.u32 %v2081, 7
      %v2083 = vsub.s32 %v2080, %v2082
      %v2084 = vrot.slane %v2077, %v2083
      %v2086 = vunpack.c.l.s4 1966171168
      %v2087 = vunpack.c.0.s8 %v2086
      %v2088 = vlaneseq
      %v2089 = vshrl.u32 %v2088, 7
      %v2090 = vsub.s32 %v2087, %v2089
      %v2091 = vrot.slane %v2073, %v2090
      %v2092 = vcombine.low %v2084, %v2091
      %v2094 = vunpack.c.l.s4 1966171168
      %v2095 = vunpack.c.0.s8 %v2094
      %v2096 = vlaneseq
      %v2097 = vshrl.u32 %v2096, 7
      %v2098 = vsub.s32 %v2095, %v2097
      %v2099 = vrot.slane %v2092, %v2098
      %2101 = vst.msk [vmem:[%s338] sm:$0x7] %vm344, %v2099
      %p2102 = scmp.lt.s32.totalorder %s21, 1
      %s2103 = scalar_select %p2102, %s21, 1
      %s2104 = smul.addr %s2103, 3
      %s2105 = scalar_lea.vmem %s8, %s2104
      %p2106 = scmp.lt.s32.totalorder %s21, 1
      %s2107 = scalar_select %p2106, %s21, 1
      %s2108 = smul.addr %s2107, 3
      %s2109 = scalar_lea.vmem %s9, %s2108
      // Predicated region
      $region53: #{flow_pixel_cnn_forward.1} parent=51 // pred_check
        %p2110 = pneg %p212
      $region54: #{flow_pixel_cnn_forward.1} parent=51 // pred_check_branch
        %2112 = sbr.rel (%p2110) target = $region56
      $region55: #{flow_pixel_cnn_forward.1} parent=51 // pred_region
        _
      $region56: #{flow_pixel_cnn_forward.1} parent=51 // pred_fallthru
        _
      // Predicated region
      $region57: #{flow_pixel_cnn_forward.1} parent=51 // pred_check
        %p2113 = pneg %p238
      $region58: #{flow_pixel_cnn_forward.1} parent=51 // pred_check_branch
        %2115 = sbr.rel (%p2113) target = $region60
      $region59: #{flow_pixel_cnn_forward.1} parent=51 // pred_region
        _
      $region60: #{flow_pixel_cnn_forward.1} parent=51 // pred_fallthru
        _
    $region52: #{flow_pixel_cnn_forward.1} parent=5 // pred_fallthru
      _
    %p2116 = scmp.le.s32.totalorder 2, %s16
    // Predicated region
    $region61: #{flow_pixel_cnn_forward.1} parent=5 // pred_check
      %p2117 = pneg %p2116
    $region62: #{flow_pixel_cnn_forward.1} parent=5 // pred_check_branch
      %2119 = sbr.rel (%p2117) target = $region64
    $region63: #{flow_pixel_cnn_forward.1} parent=5 // pred_region
      %s2120 = ssub.s32 %s16, 2
      // Predicated region
      $region65: #{flow_pixel_cnn_forward.1} parent=63 // pred_check
        %p2121 = pneg %p218
      $region66: #{flow_pixel_cnn_forward.1} parent=63 // pred_check_branch
        %2123 = sbr.rel (%p2121) target = $region68
      $region67: #{flow_pixel_cnn_forward.1} parent=63 // pred_region
        %p2124 = scmp.lt.s32.totalorder %s22, 1
        %s2125 = scalar_select %p2124, %s22, 1
        %s2126 = smul.addr %s2125, 3
        %s2127 = scalar_lea.vmem %s8, %s2126
      $region68: #{flow_pixel_cnn_forward.1} parent=63 // pred_fallthru
        _
      // Predicated region
      $region69: #{flow_pixel_cnn_forward.1} parent=63 // pred_check
        %p2128 = pneg %p244
      $region70: #{flow_pixel_cnn_forward.1} parent=63 // pred_check_branch
        %2130 = sbr.rel (%p2128) target = $region72
      $region71: #{flow_pixel_cnn_forward.1} parent=63 // pred_region
        %p2131 = scmp.lt.s32.totalorder %s22, 1
        %s2132 = scalar_select %p2131, %s22, 1
        %s2133 = smul.addr %s2132, 3
        %s2134 = scalar_lea.vmem %s9, %s2133
      $region72: #{flow_pixel_cnn_forward.1} parent=63 // pred_fallthru
        _
    $region64: #{flow_pixel_cnn_forward.1} parent=5 // pred_fallthru
      _
  $region6: #{flow_pixel_cnn_forward.1} parent=0 // loop_footer
    %s20 = sadd.s32 1, %s16
  $region7: #{flow_pixel_cnn_forward.1} parent=0 // loop_footer_branch
    %15 = sbr.rel target = $region3
  $region8: #{flow_pixel_cnn_forward.1} parent=0 // loop_exit
    _

</llo_original>
